<compile_context>
chip_gen: v7x
topology: tpu7x:2x2x1
jax: 0.10.0
libtpu: 0.0.40
codegen_flags: <defaults>
</compile_context>

<pallas_src>
import functools

import jax
import jax.numpy as jnp
import numpy as np
from jax import lax
from jax.experimental import pallas as pl
from jax.experimental.pallas import tpu as pltpu

EPS = 1e-5


def _double_conv_kernel(x_ref, w1_ref, t1_ref, w2_ref, t2_ref, mask_ref, o_ref, *, wp):
    """Fused conv3x3+BN+ReLU -> conv3x3+BN+ReLU for one group of Bt batch elements.

    x_ref:    (Cin_p, N)  channels on sublanes; N = Bt*Lp zero-padded flattened spatial
    w1_ref:   (3, Cmid_p, 3*Cin_p)   dy-folded, BN scale pre-multiplied
    t1_ref:   (Cmid_p, 1) f32        folded BN shift
    w2_ref:   (3, Cout, 3*Cmid_p)
    t2_ref:   (Cout, 1)  f32
    mask_ref: (1, N) f32             1.0 on valid output-pixel lanes (p*Wp+q), else 0.0
    o_ref:    (Cout, N)              value for pixel (p, q) of segment b at lane p*Wp+q
    """
    n = x_ref.shape[-1]

    def conv3x3(inp, w_ref, extra_off):
        # inp: (C, N). Tap (dy, dx) reads inp[:, l + dy*wp + extra_off + dx].
        # One dy-rolled copy (xr) + its 3 dx shifts (xs) live at a time -> K = 3*C
        # MXU push per dy (3 pushes per conv).
        acc = None
        for dy in range(3):
            off = dy * wp + extra_off
            xr = inp if off == 0 else pltpu.roll(inp, (n - off) % n, axis=1)
            xs = jnp.concatenate(
                [xr,
                 pltpu.roll(xr, n - 1, axis=1),
                 pltpu.roll(xr, n - 2, axis=1)],
                axis=0)                                            # (3C, N)
            part = jnp.dot(w_ref[dy], xs, preferred_element_type=jnp.float32)
            acc = part if acc is None else acc + part
        return acc                                                 # (Co, N) f32

    x = x_ref[...]                      # (Cin_p, N) compute dtype
    mask = mask_ref[...]                # (1, N) f32

    # ---- conv1 (BN scale folded into weights) + shift + ReLU ----
    y1 = jnp.maximum(conv3x3(x, w1_ref, 0) + t1_ref[...], 0.0)
    # Zero out border / tail / junk lanes so conv2's neighbor taps read zeros where the
    # padded image would be zero.  (Replaces the old roll-by-(Wp+1) re-embed.)
    y1 = (y1 * mask).astype(x.dtype)

    # ---- conv2: the re-embed offset -(Wp+1) is baked into the tap shifts ----
    y2 = jnp.maximum(conv3x3(y1, w2_ref, -(wp + 1)) + t2_ref[...], 0.0)
    o_ref[...] = y2.astype(o_ref.dtype)


def _prep_layer(w_hwio, bias, gamma, beta, mean, var, ci_pad, co_pad, compute_dtype):
    """Fold BN (inference) into conv weights/shift; pad channels; dy-fold the layout.

    Returns w: (3, co_pad, 3*ci_pad) in compute_dtype, shift: (co_pad, 1) f32.
    Row dx*ci_pad + c of w[dy] multiplies input channel c shifted left by dx lanes.
    """
    kh, kw, ci, co = w_hwio.shape
    scale = gamma / jnp.sqrt(var + EPS)                               # f32
    shift = (bias - mean) * scale + beta                              # f32
    w = w_hwio.astype(jnp.float32) * scale[None, None, None, :]       # fold scale in f32
    w = jnp.pad(w, ((0, 0), (0, 0), (0, ci_pad - ci), (0, co_pad - co)))
    shift = jnp.pad(shift, (0, co_pad - co))
    w = jnp.transpose(w, (0, 3, 1, 2)).reshape(kh, co_pad, kw * ci_pad)
    return w.astype(compute_dtype), shift.astype(jnp.float32).reshape(co_pad, 1)


def _vmem_limit_bytes():
    """Per-generation scoped-VMEM budget (None -> leave the compiler default)."""
    try:
        kind = jax.devices()[0].device_kind.lower()
    except Exception:
        return None
    if "v7" in kind or "7x" in kind:
        return 48 * 1024 * 1024        # headroom under v7x's 64 MiB physical
    if "v6" in kind or "v5e" in kind or "v5 lite" in kind or "v5lite" in kind:
        return 100 * 1024 * 1024       # v5e/v6e: 128 MiB physical
    return None


def _pick_batch_tile(B, lp, cin_p, cmid_p, cout, itemsize,
                     budget_bytes=8 * 1024 * 1024):
    """Largest divisor of B whose per-step live set stays well under scoped VMEM."""
    rows = cin_p + 4 * max(cin_p, cmid_p)          # x + xr + xs (compute dtype)
    per_elem = lp * (rows * itemsize + 2 * cout * 4 + 8)
    bt = max(1, min(B, budget_bytes // max(per_elem, 1)))
    while B % bt:
        bt -= 1
    return bt


def conv_block_forward(x_nchw, params, *, compute_dtype=jnp.float32, out_dtype=None):
    """Forward of conv_block (if_dropout=False / eval). Input is NCHW f32."""
    if out_dtype is None:
        out_dtype = jnp.float32
    B, Cin, H, W = x_nchw.shape
    Cmid = params["w1"].shape[-1]
    Cout = params["w2"].shape[-1]
    Hp, Wp = H + 2, W + 2
    Npos = Hp * Wp
    Lp = ((Npos + 127) // 128) * 128               # lane-dense flattened spatial length

    itemsize = jnp.dtype(compute_dtype).itemsize
    sub = 8 * (4 // itemsize)                      # sublane tile: 8 (f32) / 16 (bf16)
    cin_p = ((Cin + sub - 1) // sub) * sub         # always take the dx-folded MXU path
    cmid_p = ((Cmid + sub - 1) // sub) * sub

    w1, t1 = _prep_layer(params["w1"], params["b1"], params["g1"], params["be1"],
                         params["m1"], params["v1"], cin_p, cmid_p, compute_dtype)
    w2, t2 = _prep_layer(params["w2"], params["b2"], params["g2"], params["be2"],
                         params["m2"], params["v2"], cmid_p, Cout, compute_dtype)

    bt = _pick_batch_tile(B, Lp, cin_p, cmid_p, Cout, itemsize)
    grid = (B // bt,)

    # Host-side glue: pad channels + spatial, flatten spatial onto lanes, merge Bt
    # batch elements onto the lane axis.  (See TODO: keep this layout between blocks.)
    xp = jnp.pad(x_nchw.astype(compute_dtype),
                 ((0, 0), (0, cin_p - Cin), (1, 1), (1, 1)))        # (B, cin_p, Hp, Wp)
    xflat = jnp.pad(xp.reshape(B, cin_p, Npos), ((0, 0), (0, 0), (0, Lp - Npos)))
    xflat = jnp.transpose(xflat, (1, 0, 2)).reshape(cin_p, B * Lp)

    # Valid-output-lane mask: pixel (p, q) of every segment lives at lane p*Wp + q.
    idx = jnp.arange(Lp)
    valid = ((idx // Wp) < H) & ((idx % Wp) < W)
    mask = jnp.tile(valid.astype(jnp.float32), bt).reshape(1, bt * Lp)

    kernel = functools.partial(_double_conv_kernel, wp=Wp)
    yflat = pl.pallas_call(
        kernel,
        out_shape=jax.ShapeDtypeStruct((Cout, B * Lp), out_dtype),
        grid_spec=pltpu.PrefetchScalarGridSpec(
            num_scalar_prefetch=0,
            grid=grid,
            in_specs=[
                pl.BlockSpec((cin_p, bt * Lp), lambda g: (0, g)),
                pl.BlockSpec(w1.shape, lambda g: (0, 0, 0)),
                pl.BlockSpec(t1.shape, lambda g: (0, 0)),
                pl.BlockSpec(w2.shape, lambda g: (0, 0, 0)),
                pl.BlockSpec(t2.shape, lambda g: (0, 0)),
                pl.BlockSpec((1, bt * Lp), lambda g: (0, 0)),
            ],
            out_specs=pl.BlockSpec((Cout, bt * Lp), lambda g: (0, g)),
        ),
        compiler_params=pltpu.CompilerParams(
            dimension_semantics=("parallel",),
            vmem_limit_bytes=_vmem_limit_bytes(),
        ),
    )(xflat, w1, t1, w2, t2, mask)

    # Un-lay: value for output pixel (p, q) of batch b sits at lane p*Wp + q of seg b.
    y = jnp.transpose(yflat.reshape(Cout, B, Lp), (1, 0, 2))
    return y[:, :, :Npos].reshape(B, Cout, Hp, Wp)[:, :, :H, :W]


def init_params(key, ch_in, ch_out):
    ks = jax.random.split(key, 12)
    return {
        # conv weights stored HWIO; deterministic synthetic init
        "w1": 0.1 * jax.random.normal(ks[0], (3, 3, ch_in, ch_out), jnp.float32),
        "b1": 0.05 * jax.random.normal(ks[1], (ch_out,), jnp.float32),
        "g1": 1.0 + 0.1 * jax.random.normal(ks[2], (ch_out,), jnp.float32),
        "be1": 0.05 * jax.random.normal(ks[3], (ch_out,), jnp.float32),
        "m1": 0.05 * jax.random.normal(ks[4], (ch_out,), jnp.float32),
        "v1": 1.0 + 0.1 * jax.random.uniform(ks[5], (ch_out,), jnp.float32),
        "w2": 0.1 * jax.random.normal(ks[6], (3, 3, ch_out, ch_out), jnp.float32),
        "b2": 0.05 * jax.random.normal(ks[7], (ch_out,), jnp.float32),
        "g2": 1.0 + 0.1 * jax.random.normal(ks[8], (ch_out,), jnp.float32),
        "be2": 0.05 * jax.random.normal(ks[9], (ch_out,), jnp.float32),
        "m2": 0.05 * jax.random.normal(ks[10], (ch_out,), jnp.float32),
        "v2": 1.0 + 0.1 * jax.random.uniform(ks[11], (ch_out,), jnp.float32),
    }


def reference_forward(x_nchw, params):
    """Pure-JAX reference (conv_general_dilated) for verification."""
    x = jnp.transpose(x_nchw, (0, 2, 3, 1)).astype(jnp.float32)

    def block(x, w, b, g, be, m, v):
        y = lax.conv_general_dilated(
            x, w, window_strides=(1, 1), padding="SAME",
            dimension_numbers=("NHWC", "HWIO", "NHWC")) + b
        y = (y - m) / jnp.sqrt(v + EPS) * g + be
        return jnp.maximum(y, 0.0)

    x = block(x, params["w1"], params["b1"], params["g1"], params["be1"],
              params["m1"], params["v1"])
    x = block(x, params["w2"], params["b2"], params["g2"], params["be2"],
              params["m2"], params["v2"])
    return jnp.transpose(x, (0, 3, 1, 2))


if __name__ == "__main__":
    B, C_IN, C_OUT, H, W = 2, 4, 8, 16, 16

    key = jax.random.PRNGKey(0)
    k_x, k_p = jax.random.split(key)
    x = jax.random.normal(k_x, (B, C_IN, H, W), jnp.float32)
    params = init_params(k_p, C_IN, C_OUT)

    ref = jax.block_until_ready(reference_forward(x, params))

    # f32 path (exact module semantics)
    out = jax.block_until_ready(conv_block_forward(x, params))
    assert out.shape == (B, C_OUT, H, W), out.shape
    np.testing.assert_allclose(np.asarray(out), np.asarray(ref),
                               rtol=1e-3, atol=1e-3)

    # bf16 activations/weights (f32 MXU accumulation + f32 epilogue), bf16 output
    out_bf16 = jax.block_until_ready(
        conv_block_forward(x, params, compute_dtype=jnp.bfloat16,
                           out_dtype=jnp.bfloat16))
    np.testing.assert_allclose(np.asarray(out_bf16).astype(np.float32),
                               np.asarray(ref), rtol=5e-2, atol=5e-2)

    print("KERNEL_OK")
</pallas_src>

<mosaic_0001>
module attributes {stable_mosaic.version = 11 : i64} {
  func.func @_double_conv_kernel(%arg0: i32, %arg1: memref<8x768xf32, #tpu.memory_space<vmem>>, %arg2: memref<3x8x24xf32, #tpu.memory_space<vmem>>, %arg3: memref<8x1xf32, #tpu.memory_space<vmem>>, %arg4: memref<3x8x24xf32, #tpu.memory_space<vmem>>, %arg5: memref<8x1xf32, #tpu.memory_space<vmem>>, %arg6: memref<1x768xf32, #tpu.memory_space<vmem>>, %arg7: memref<8x768xf32, #tpu.memory_space<vmem>>) attributes {dimension_semantics = [#tpu.dimension_semantics<parallel>], iteration_bounds = array<i64: 1>, scalar_prefetch = 0 : i64, scratch_operands = 0 : i64, tpu.core_type = #tpu.core_type<tc>, window_params = [{transform_indices = @transform_0, window_bounds = array<i64: 8, 768>}, {pipeline_mode = #tpu.pipeline_mode<synchronous>, transform_indices = @transform_1, window_bounds = array<i64: 3, 8, 24>}, {pipeline_mode = #tpu.pipeline_mode<synchronous>, transform_indices = @transform_2, window_bounds = array<i64: 8, 1>}, {pipeline_mode = #tpu.pipeline_mode<synchronous>, transform_indices = @transform_3, window_bounds = array<i64: 3, 8, 24>}, {pipeline_mode = #tpu.pipeline_mode<synchronous>, transform_indices = @transform_4, window_bounds = array<i64: 8, 1>}, {pipeline_mode = #tpu.pipeline_mode<synchronous>, transform_indices = @transform_5, window_bounds = array<i64: 1, 768>}, {transform_indices = @transform_6, window_bounds = array<i64: 8, 768>}]} {
    %c0 = arith.constant 0 : index
    %c0_0 = arith.constant 0 : index
    %0 = vector.load %arg1[%c0, %c0_0] : memref<8x768xf32, #tpu.memory_space<vmem>>, vector<8x768xf32>
    %c0_1 = arith.constant 0 : index
    %c0_2 = arith.constant 0 : index
    %1 = vector.load %arg6[%c0_1, %c0_2] : memref<1x768xf32, #tpu.memory_space<vmem>>, vector<1x768xf32>
    %c767_i32 = arith.constant 767 : i32
    %2 = tpu.dynamic_rotate %0 by %c767_i32 dim 1 : vector<8x768xf32>, i32 -> vector<8x768xf32>
    %c766_i32 = arith.constant 766 : i32
    %3 = tpu.dynamic_rotate %0 by %c766_i32 dim 1 : vector<8x768xf32>, i32 -> vector<8x768xf32>
    %4 = tpu.concatenate %0, %2, %3 in 0 : vector<8x768xf32>, vector<8x768xf32>, vector<8x768xf32> -> vector<24x768xf32>
    %c0_3 = arith.constant 0 : index
    %c0_4 = arith.constant 0 : index
    %c0_5 = arith.constant 0 : index
    %5 = vector.load %arg2[%c0_3, %c0_4, %c0_5] : memref<3x8x24xf32, #tpu.memory_space<vmem>>, vector<1x8x24xf32>
    %6 = vector.shape_cast %5 : vector<1x8x24xf32> to vector<8x24xf32>
    %cst = arith.constant dense<0.000000e+00> : vector<8x768xf32>
    %7 = tpu.matmul %6, %4, %cst {dimension_numbers = #tpu.dot_dimension_numbers<[1], [0], [0], [1], [0, 0, 1, 1], [], []>} : vector<8x24xf32>, vector<24x768xf32>, vector<8x768xf32> -> vector<8x768xf32>
    %c750_i32 = arith.constant 750 : i32
    %8 = tpu.dynamic_rotate %0 by %c750_i32 dim 1 : vector<8x768xf32>, i32 -> vector<8x768xf32>
    %c767_i32_6 = arith.constant 767 : i32
    %9 = tpu.dynamic_rotate %8 by %c767_i32_6 dim 1 : vector<8x768xf32>, i32 -> vector<8x768xf32>
    %c766_i32_7 = arith.constant 766 : i32
    %10 = tpu.dynamic_rotate %8 by %c766_i32_7 dim 1 : vector<8x768xf32>, i32 -> vector<8x768xf32>
    %11 = tpu.concatenate %8, %9, %10 in 0 : vector<8x768xf32>, vector<8x768xf32>, vector<8x768xf32> -> vector<24x768xf32>
    %c1 = arith.constant 1 : index
    %c0_8 = arith.constant 0 : index
    %c0_9 = arith.constant 0 : index
    %12 = vector.load %arg2[%c1, %c0_8, %c0_9] : memref<3x8x24xf32, #tpu.memory_space<vmem>>, vector<1x8x24xf32>
    %13 = vector.shape_cast %12 : vector<1x8x24xf32> to vector<8x24xf32>
    %cst_10 = arith.constant dense<0.000000e+00> : vector<8x768xf32>
    %14 = tpu.matmul %13, %11, %cst_10 {dimension_numbers = #tpu.dot_dimension_numbers<[1], [0], [0], [1], [0, 0, 1, 1], [], []>} : vector<8x24xf32>, vector<24x768xf32>, vector<8x768xf32> -> vector<8x768xf32>
    %15 = arith.addf %7, %14 : vector<8x768xf32>
    %c732_i32 = arith.constant 732 : i32
    %16 = tpu.dynamic_rotate %0 by %c732_i32 dim 1 : vector<8x768xf32>, i32 -> vector<8x768xf32>
    %c767_i32_11 = arith.constant 767 : i32
    %17 = tpu.dynamic_rotate %16 by %c767_i32_11 dim 1 : vector<8x768xf32>, i32 -> vector<8x768xf32>
    %c766_i32_12 = arith.constant 766 : i32
    %18 = tpu.dynamic_rotate %16 by %c766_i32_12 dim 1 : vector<8x768xf32>, i32 -> vector<8x768xf32>
    %19 = tpu.concatenate %16, %17, %18 in 0 : vector<8x768xf32>, vector<8x768xf32>, vector<8x768xf32> -> vector<24x768xf32>
    %c2 = arith.constant 2 : index
    %c0_13 = arith.constant 0 : index
    %c0_14 = arith.constant 0 : index
    %20 = vector.load %arg2[%c2, %c0_13, %c0_14] : memref<3x8x24xf32, #tpu.memory_space<vmem>>, vector<1x8x24xf32>
    %21 = vector.shape_cast %20 : vector<1x8x24xf32> to vector<8x24xf32>
    %cst_15 = arith.constant dense<0.000000e+00> : vector<8x768xf32>
    %22 = tpu.matmul %21, %19, %cst_15 {dimension_numbers = #tpu.dot_dimension_numbers<[1], [0], [0], [1], [0, 0, 1, 1], [], []>} : vector<8x24xf32>, vector<24x768xf32>, vector<8x768xf32> -> vector<8x768xf32>
    %23 = arith.addf %15, %22 : vector<8x768xf32>
    %c0_16 = arith.constant 0 : index
    %c0_17 = arith.constant 0 : index
    %24 = vector.load %arg3[%c0_16, %c0_17] : memref<8x1xf32, #tpu.memory_space<vmem>>, vector<8x1xf32>
    %25 = vector.broadcast %24 : vector<8x1xf32> to vector<8x768xf32>
    %26 = arith.addf %23, %25 : vector<8x768xf32>
    %cst_18 = arith.constant 0.000000e+00 : f32
    %27 = vector.broadcast %cst_18 : f32 to vector<8x768xf32>
    %28 = arith.maximumf %26, %27 : vector<8x768xf32>
    %29 = vector.broadcast %1 : vector<1x768xf32> to vector<8x768xf32>
    %30 = arith.mulf %28, %29 : vector<8x768xf32>
    %c19_i32 = arith.constant 19 : i32
    %31 = tpu.dynamic_rotate %30 by %c19_i32 dim 1 : vector<8x768xf32>, i32 -> vector<8x768xf32>
    %c767_i32_19 = arith.constant 767 : i32
    %32 = tpu.dynamic_rotate %31 by %c767_i32_19 dim 1 : vector<8x768xf32>, i32 -> vector<8x768xf32>
    %c766_i32_20 = arith.constant 766 : i32
    %33 = tpu.dynamic_rotate %31 by %c766_i32_20 dim 1 : vector<8x768xf32>, i32 -> vector<8x768xf32>
    %34 = tpu.concatenate %31, %32, %33 in 0 : vector<8x768xf32>, vector<8x768xf32>, vector<8x768xf32> -> vector<24x768xf32>
    %c0_21 = arith.constant 0 : index
    %c0_22 = arith.constant 0 : index
    %c0_23 = arith.constant 0 : index
    %35 = vector.load %arg4[%c0_21, %c0_22, %c0_23] : memref<3x8x24xf32, #tpu.memory_space<vmem>>, vector<1x8x24xf32>
    %36 = vector.shape_cast %35 : vector<1x8x24xf32> to vector<8x24xf32>
    %cst_24 = arith.constant dense<0.000000e+00> : vector<8x768xf32>
    %37 = tpu.matmul %36, %34, %cst_24 {dimension_numbers = #tpu.dot_dimension_numbers<[1], [0], [0], [1], [0, 0, 1, 1], [], []>} : vector<8x24xf32>, vector<24x768xf32>, vector<8x768xf32> -> vector<8x768xf32>
    %c1_i32 = arith.constant 1 : i32
    %38 = tpu.dynamic_rotate %30 by %c1_i32 dim 1 : vector<8x768xf32>, i32 -> vector<8x768xf32>
    %c767_i32_25 = arith.constant 767 : i32
    %39 = tpu.dynamic_rotate %38 by %c767_i32_25 dim 1 : vector<8x768xf32>, i32 -> vector<8x768xf32>
    %c766_i32_26 = arith.constant 766 : i32
    %40 = tpu.dynamic_rotate %38 by %c766_i32_26 dim 1 : vector<8x768xf32>, i32 -> vector<8x768xf32>
    %41 = tpu.concatenate %38, %39, %40 in 0 : vector<8x768xf32>, vector<8x768xf32>, vector<8x768xf32> -> vector<24x768xf32>
    %c1_27 = arith.constant 1 : index
    %c0_28 = arith.constant 0 : index
    %c0_29 = arith.constant 0 : index
    %42 = vector.load %arg4[%c1_27, %c0_28, %c0_29] : memref<3x8x24xf32, #tpu.memory_space<vmem>>, vector<1x8x24xf32>
    %43 = vector.shape_cast %42 : vector<1x8x24xf32> to vector<8x24xf32>
    %cst_30 = arith.constant dense<0.000000e+00> : vector<8x768xf32>
    %44 = tpu.matmul %43, %41, %cst_30 {dimension_numbers = #tpu.dot_dimension_numbers<[1], [0], [0], [1], [0, 0, 1, 1], [], []>} : vector<8x24xf32>, vector<24x768xf32>, vector<8x768xf32> -> vector<8x768xf32>
    %45 = arith.addf %37, %44 : vector<8x768xf32>
    %c751_i32 = arith.constant 751 : i32
    %46 = tpu.dynamic_rotate %30 by %c751_i32 dim 1 : vector<8x768xf32>, i32 -> vector<8x768xf32>
    %c767_i32_31 = arith.constant 767 : i32
    %47 = tpu.dynamic_rotate %46 by %c767_i32_31 dim 1 : vector<8x768xf32>, i32 -> vector<8x768xf32>
    %c766_i32_32 = arith.constant 766 : i32
    %48 = tpu.dynamic_rotate %46 by %c766_i32_32 dim 1 : vector<8x768xf32>, i32 -> vector<8x768xf32>
    %49 = tpu.concatenate %46, %47, %48 in 0 : vector<8x768xf32>, vector<8x768xf32>, vector<8x768xf32> -> vector<24x768xf32>
    %c2_33 = arith.constant 2 : index
    %c0_34 = arith.constant 0 : index
    %c0_35 = arith.constant 0 : index
    %50 = vector.load %arg4[%c2_33, %c0_34, %c0_35] : memref<3x8x24xf32, #tpu.memory_space<vmem>>, vector<1x8x24xf32>
    %51 = vector.shape_cast %50 : vector<1x8x24xf32> to vector<8x24xf32>
    %cst_36 = arith.constant dense<0.000000e+00> : vector<8x768xf32>
    %52 = tpu.matmul %51, %49, %cst_36 {dimension_numbers = #tpu.dot_dimension_numbers<[1], [0], [0], [1], [0, 0, 1, 1], [], []>} : vector<8x24xf32>, vector<24x768xf32>, vector<8x768xf32> -> vector<8x768xf32>
    %53 = arith.addf %45, %52 : vector<8x768xf32>
    %c0_37 = arith.constant 0 : index
    %c0_38 = arith.constant 0 : index
    %54 = vector.load %arg5[%c0_37, %c0_38] : memref<8x1xf32, #tpu.memory_space<vmem>>, vector<8x1xf32>
    %55 = vector.broadcast %54 : vector<8x1xf32> to vector<8x768xf32>
    %56 = arith.addf %53, %55 : vector<8x768xf32>
    %cst_39 = arith.constant 0.000000e+00 : f32
    %57 = vector.broadcast %cst_39 : f32 to vector<8x768xf32>
    %58 = arith.maximumf %56, %57 : vector<8x768xf32>
    %c0_40 = arith.constant 0 : index
    %c0_41 = arith.constant 0 : index
    %59 = vector.load %arg7[%c0_40, %c0_41] : memref<8x768xf32, #tpu.memory_space<vmem>>, vector<8x768xf32>
    tpu.vector_store %arg7[%c0_40, %c0_41], %58 {strides = array<i32>} : memref<8x768xf32, #tpu.memory_space<vmem>>, vector<8x768xf32>,
    return
  }
  func.func @transform_0(%arg0: i32) -> (i32, i32) {
    %c0_i32 = arith.constant 0 : i32
    %c0_i32_0 = arith.constant 0 : i32
    return %c0_i32, %arg0 : i32, i32
  }
  func.func @transform_1(%arg0: i32) -> (i32, i32, i32) {
    %c0_i32 = arith.constant 0 : i32
    %c0_i32_0 = arith.constant 0 : i32
    %c0_i32_1 = arith.constant 0 : i32
    %c0_i32_2 = arith.constant 0 : i32
    return %c0_i32, %c0_i32_0, %c0_i32_1 : i32, i32, i32
  }
  func.func @transform_2(%arg0: i32) -> (i32, i32) {
    %c0_i32 = arith.constant 0 : i32
    %c0_i32_0 = arith.constant 0 : i32
    %c0_i32_1 = arith.constant 0 : i32
    return %c0_i32, %c0_i32_0 : i32, i32
  }
  func.func @transform_3(%arg0: i32) -> (i32, i32, i32) {
    %c0_i32 = arith.constant 0 : i32
    %c0_i32_0 = arith.constant 0 : i32
    %c0_i32_1 = arith.constant 0 : i32
    %c0_i32_2 = arith.constant 0 : i32
    return %c0_i32, %c0_i32_0, %c0_i32_1 : i32, i32, i32
  }
  func.func @transform_4(%arg0: i32) -> (i32, i32) {
    %c0_i32 = arith.constant 0 : i32
    %c0_i32_0 = arith.constant 0 : i32
    %c0_i32_1 = arith.constant 0 : i32
    return %c0_i32, %c0_i32_0 : i32, i32
  }
  func.func @transform_5(%arg0: i32) -> (i32, i32) {
    %c0_i32 = arith.constant 0 : i32
    %c0_i32_0 = arith.constant 0 : i32
    %c0_i32_1 = arith.constant 0 : i32
    return %c0_i32, %c0_i32_0 : i32, i32
  }
  func.func @transform_6(%arg0: i32) -> (i32, i32) {
    %c0_i32 = arith.constant 0 : i32
    %c0_i32_0 = arith.constant 0 : i32
    return %c0_i32, %arg0 : i32, i32
  }
}

</mosaic_0001>

<llo_original>
// kernel: tpu_custom_call.1
$region0: #{tpu_custom_call.1}
  #allocation0 [shape = 'u32[]', space=smem, size = 0x4, offset = 0x4, fixed_abs, tag = 'smem constant byte address 0x4 - core index']
  #allocation1 [shape = 'u32[144,128]{1,0:T(1,128)}', space=vmem, size = 0x12000, scoped, tag = 'internal scratch']
  %s0 = inlined_call_operand.hbm [shape: f32[8,768], index: 0, kind: input, shape index: {}]
  %s1 = inlined_call_operand.hbm [shape: f32[3,8,24], index: 1, kind: input, shape index: {}]
  %s2 = inlined_call_operand.vmem [shape: f32[8,1], index: 2, kind: input, shape index: {}]
  %s3 = inlined_call_operand.vmem [shape: f32[3,8,24], index: 3, kind: input, shape index: {}]
  %s4 = inlined_call_operand.vmem [shape: f32[8,1], index: 4, kind: input, shape index: {}]
  %s5 = inlined_call_operand.vmem [shape: f32[1,768], index: 5, kind: input, shape index: {}]
  %s6 = inlined_call_operand.hbm [shape: f32[8,768], index: 6, kind: output, shape index: {}]
  %s7 = sld [smem:[#allocation0]]
  $region42: #{tpu_custom_call.1} parent=0
    _
  %s9 = ssub.s32 1, %s7
  %s10 = scalar_select 0, %s9, %s7
  $region1: #{tpu_custom_call.1} parent=0
    #allocation2 [shape = 'u8[24576]{0}', space=vmem, size = 0x6000, scoped, tag = 'input window, operand 0, single buffered']
    #allocation3 [shape = 's32[1]{0}', space=sflag, size = 0x4, scoped, tag = 'scoped memory for tpu_custom_call.1']
    #allocation4 [shape = 's32[1]{0}', space=sflag, size = 0x4, scoped, tag = 'scoped memory for tpu_custom_call.1']
    #allocation5 [shape = 'u8[12288]{0}', space=vmem, size = 0x3000, scoped, tag = 'input window, operand 1, single buffered']
    #allocation6 [shape = 's32[1]{0}', space=sflag, size = 0x4, scoped, tag = 'scoped memory for tpu_custom_call.1']
    #allocation7 [shape = 'u8[24576]{0}', space=vmem, size = 0x6000, scoped, tag = 'output window, operand 0, single buffered']
    %11 = vsyncpa [#allocation3], 0
    %12 = vsyncpa [#allocation6], 0
    %13 = vsyncpa [#allocation4], 0
    // Predicated region
    $region2: #{tpu_custom_call.1} parent=1 // pred_check
      _
    $region3: #{tpu_custom_call.1} parent=1 // pred_check_branch
      %15 = sbr.rel (0) target = $region5
    $region4: #{tpu_custom_call.1} parent=1 // pred_region
      %s17 = ssub.s32 768, 768
      %18 = vsyncadd [#allocation3], %s17
      %s20 = sshll.u32 [#allocation2], 4
      %s21 = int_to_ptr.vmem [resolvable:$true] %s20
      %23 = dma.hbm_to_vmem [thread:$0]  %s0, 768, %s21, [#allocation3]
    $region5: #{tpu_custom_call.1} parent=1 // pred_fallthru
      _
    // Predicated region
    $region6: #{tpu_custom_call.1} parent=1 // pred_check
      _
    $region7: #{tpu_custom_call.1} parent=1 // pred_check_branch
      %25 = sbr.rel (0) target = $region9
    $region8: #{tpu_custom_call.1} parent=1 // pred_region
      %s27 = ssub.s32 384, 384
      %28 = vsyncadd [#allocation6], %s27
      %s29 = sshll.u32 [#allocation5], 4
      %s30 = int_to_ptr.vmem [resolvable:$true] %s29
      %35 = dma.hbm_to_vmem [thread:$0]  %s1, 384, %s30, [#allocation6], 128, 128, 8
    $region9: #{tpu_custom_call.1} parent=1 // pred_fallthru
      _
    // Predicated region
    $region10: #{tpu_custom_call.1} parent=1 // pred_check
      _
    $region11: #{tpu_custom_call.1} parent=1 // pred_check_branch
      %37 = sbr.rel (0) target = $region13
    $region12: #{tpu_custom_call.1} parent=1 // pred_region
      _
    $region13: #{tpu_custom_call.1} parent=1 // pred_fallthru
      _
    // Predicated region
    $region14: #{tpu_custom_call.1} parent=1 // pred_check
      _
    $region15: #{tpu_custom_call.1} parent=1 // pred_check_branch
      %39 = sbr.rel (0) target = $region17
    $region16: #{tpu_custom_call.1} parent=1 // pred_region
      _
    $region17: #{tpu_custom_call.1} parent=1 // pred_fallthru
      _
    // Predicated region
    $region18: #{tpu_custom_call.1} parent=1 // pred_check
      _
    $region19: #{tpu_custom_call.1} parent=1 // pred_check_branch
      %41 = sbr.rel (0) target = $region21
    $region20: #{tpu_custom_call.1} parent=1 // pred_region
      _
    $region21: #{tpu_custom_call.1} parent=1 // pred_fallthru
      _
    // Predicated region
    $region22: #{tpu_custom_call.1} parent=1 // pred_check
      _
    $region23: #{tpu_custom_call.1} parent=1 // pred_check_branch
      %43 = sbr.rel (0) target = $region25
    $region24: #{tpu_custom_call.1} parent=1 // pred_region
      _
    $region25: #{tpu_custom_call.1} parent=1 // pred_fallthru
      _
    // Predicated region
    $region26: #{tpu_custom_call.1} parent=1 // pred_check
      _
    $region27: #{tpu_custom_call.1} parent=1 // pred_check_branch
      %45 = sbr.rel (0) target = $region29
    $region28: #{tpu_custom_call.1} parent=1 // pred_region
      %46 = dma.done [#allocation3], 768
    $region29: #{tpu_custom_call.1} parent=1 // pred_fallthru
      _
    // Predicated region
    $region30: #{tpu_custom_call.1} parent=1 // pred_check
      _
    $region31: #{tpu_custom_call.1} parent=1 // pred_check_branch
      %48 = sbr.rel (0) target = $region33
    $region32: #{tpu_custom_call.1} parent=1 // pred_region
      %49 = dma.done [#allocation6], 384
    $region33: #{tpu_custom_call.1} parent=1 // pred_fallthru
      _
    %v50 = vld [vmem:[#allocation2] sm:$0xff]
    %v51 = vld [vmem:[#allocation2 + $0x8] sm:$0xff]
    %v52 = vld [vmem:[#allocation2 + $0x10] sm:$0xff]
    %v53 = vld [vmem:[#allocation2 + $0x18] sm:$0xff]
    %v54 = vld [vmem:[#allocation2 + $0x20] sm:$0xff]
    %v55 = vld [vmem:[#allocation2 + $0x28] sm:$0xff]
    %v56 = vld [vmem:[%s5] sm:$0x3f]
    %57 = vrot.lane.b32.xlu0 %v50, 127
    %v58 = vpop.permute.xlu0 %57
    %59 = vrot.lane.b32.xlu0 %v51, 127
    %v60 = vpop.permute.xlu0 %59
    %61 = vrot.lane.b32.xlu0 %v52, 127
    %v62 = vpop.permute.xlu0 %61
    %63 = vrot.lane.b32.xlu0 %v53, 127
    %v64 = vpop.permute.xlu0 %63
    %65 = vrot.lane.b32.xlu0 %v54, 127
    %v66 = vpop.permute.xlu0 %65
    %67 = vrot.lane.b32.xlu0 %v55, 127
    %v68 = vpop.permute.xlu0 %67
    %v69 = vlaneseq
    %v70 = vand.u32 %v69, 127
    %vm71 = vcmp.lt.s32.totalorder %v70, 127
    %v72 = vsel %vm71, %v66, %v68
    %v73 = vsel %vm71, %v64, %v66
    %v74 = vsel %vm71, %v62, %v64
    %v75 = vsel %vm71, %v60, %v62
    %v76 = vsel %vm71, %v58, %v60
    %v77 = vsel %vm71, %v68, %v58
    %78 = vrot.lane.b32.xlu0 %v50, 126
    %v79 = vpop.permute.xlu0 %78
    %80 = vrot.lane.b32.xlu0 %v51, 126
    %v81 = vpop.permute.xlu0 %80
    %82 = vrot.lane.b32.xlu0 %v52, 126
    %v83 = vpop.permute.xlu0 %82
    %84 = vrot.lane.b32.xlu0 %v53, 126
    %v85 = vpop.permute.xlu0 %84
    %86 = vrot.lane.b32.xlu0 %v54, 126
    %v87 = vpop.permute.xlu0 %86
    %88 = vrot.lane.b32.xlu0 %v55, 126
    %v89 = vpop.permute.xlu0 %88
    %vm90 = vcmp.lt.s32.totalorder %v70, 126
    %v91 = vsel %vm90, %v87, %v89
    %v92 = vsel %vm90, %v85, %v87
    %v93 = vsel %vm90, %v83, %v85
    %v94 = vsel %vm90, %v81, %v83
    %v95 = vsel %vm90, %v79, %v81
    %v96 = vsel %vm90, %v89, %v79
    %v97 = vld [vmem:[#allocation5] sm:$0xff]
    %98 = vrot.lane.b32.xlu0 %v50, 110
    %v99 = vpop.permute.xlu0 %98
    %100 = vrot.lane.b32.xlu0 %v51, 110
    %v101 = vpop.permute.xlu0 %100
    %102 = vrot.lane.b32.xlu0 %v52, 110
    %v103 = vpop.permute.xlu0 %102
    %104 = vrot.lane.b32.xlu0 %v53, 110
    %v105 = vpop.permute.xlu0 %104
    %106 = vrot.lane.b32.xlu0 %v54, 110
    %v107 = vpop.permute.xlu0 %106
    %108 = vrot.lane.b32.xlu0 %v55, 110
    %v109 = vpop.permute.xlu0 %108
    %vm110 = vcmp.lt.s32.totalorder %v70, 110
    %v111 = vsel %vm110, %v107, %v109
    %v112 = vsel %vm110, %v105, %v107
    %v113 = vsel %vm110, %v103, %v105
    %v114 = vsel %vm110, %v101, %v103
    %v115 = vsel %vm110, %v99, %v101
    %v116 = vsel %vm110, %v109, %v99
    %117 = vrot.lane.b32.xlu0 %v115, 127
    %v118 = vpop.permute.xlu0 %117
    %119 = vrot.lane.b32.xlu0 %v114, 127
    %v120 = vpop.permute.xlu0 %119
    %121 = vrot.lane.b32.xlu0 %v113, 127
    %v122 = vpop.permute.xlu0 %121
    %123 = vrot.lane.b32.xlu0 %v112, 127
    %v124 = vpop.permute.xlu0 %123
    %125 = vrot.lane.b32.xlu0 %v111, 127
    %v126 = vpop.permute.xlu0 %125
    %127 = vrot.lane.b32.xlu0 %v116, 127
    %v128 = vpop.permute.xlu0 %127
    %v129 = vsel %vm71, %v126, %v128
    %v130 = vsel %vm71, %v124, %v126
    %v131 = vsel %vm71, %v122, %v124
    %v132 = vsel %vm71, %v120, %v122
    %v133 = vsel %vm71, %v118, %v120
    %v134 = vsel %vm71, %v128, %v118
    %135 = vrot.lane.b32.xlu0 %v115, 126
    %v136 = vpop.permute.xlu0 %135
    %137 = vrot.lane.b32.xlu0 %v114, 126
    %v138 = vpop.permute.xlu0 %137
    %139 = vrot.lane.b32.xlu0 %v113, 126
    %v140 = vpop.permute.xlu0 %139
    %141 = vrot.lane.b32.xlu0 %v112, 126
    %v142 = vpop.permute.xlu0 %141
    %143 = vrot.lane.b32.xlu0 %v111, 126
    %v144 = vpop.permute.xlu0 %143
    %145 = vrot.lane.b32.xlu0 %v116, 126
    %v146 = vpop.permute.xlu0 %145
    %v147 = vsel %vm90, %v144, %v146
    %v148 = vsel %vm90, %v142, %v144
    %v149 = vsel %vm90, %v140, %v142
    %v150 = vsel %vm90, %v138, %v140
    %v151 = vsel %vm90, %v136, %v138
    %v152 = vsel %vm90, %v146, %v136
    %s153 = scalar_lea.vmem [#allocation5], 8
    %v154 = vld [vmem:[%s153] sm:$0xff]
    %vm155 = vcmask 195584
    %v157 = vsel %vm155, %v154, 0
    %159 = vmatprep.subr.mxu0 %v114
    %160 = vmatpush1.msra.mxu0 %v115
    %161 = vmatprep.subr.mxu0 %v132
    %162 = vmatpush1.msra.mxu0 %v133
    %163 = vmatprep.subr.mxu0 %v150
    %164 = vmatpush1.msra.mxu0 %v151
    %165 = vmatprep.subr.mxu0 0.0
    %166 = vmatpush1.msra.mxu0 0.0
    %167 = vmatprep.subr.mxu0 0.0
    %168 = vmatpush1.msra.mxu0 0.0
    %169 = vmatprep.subr.mxu0 0.0
    %170 = vmatpush1.msra.mxu0 0.0
    %171 = vmatprep.subr.mxu0 0.0
    %172 = vmatpush1.msra.mxu0 0.0
    %173 = vmatprep.subr.mxu0 0.0
    %174 = vmatpush1.msra.mxu0 0.0
    %175 = vmatprep.subr.mxu0 0.0
    %176 = vmatpush1.msra.mxu0 0.0
    %177 = vmatprep.subr.mxu0 0.0
    %178 = vmatpush1.msra.mxu0 0.0
    %179 = vmatprep.subr.mxu0 0.0
    %180 = vmatpush1.msra.mxu0 0.0
    %181 = vmatprep.subr.mxu0 0.0
    %182 = vmatpush1.msra.mxu0 0.0
    %183 = vmatprep.subr.mxu0 0.0
    %184 = vmatpush1.msra.mxu0 0.0
    %185 = vmatprep.subr.mxu0 0.0
    %186 = vmatpush1.msra.mxu0 0.0
    %187 = vmatprep.subr.mxu0 0.0
    %188 = vmatpush1.msra.mxu0 0.0
    %189 = vmatprep.subr.mxu0 0.0
    %190 = vmatpush1.msra.mxu0 0.0
    %191 = vmatprep.subr.mxu0 0.0
    %192 = vmatpush1.msra.mxu0 0.0
    %193 = vmatprep.subr.mxu0 0.0
    %194 = vmatpush1.msra.mxu0 0.0
    %195 = vmatprep.subr.mxu0 0.0
    %196 = vmatpush1.msra.mxu0 0.0
    %197 = vmatprep.subr.mxu0 0.0
    %198 = vmatpush1.msra.mxu0 0.0
    %199 = vmatprep.subr.mxu0 0.0
    %200 = vmatpush1.msra.mxu0 0.0
    %201 = vmatprep.subr.mxu0 0.0
    %202 = vmatpush1.msra.mxu0 0.0
    %203 = vmatprep.subr.mxu0 0.0
    %204 = vmatpush1.msra.mxu0 0.0
    %205 = vmatprep.subr.mxu0 0.0
    %206 = vmatpush1.msra.mxu0 0.0
    %207 = vmatprep.subr.mxu0 0.0
    %208 = vmatpush1.msra.mxu0 0.0
    %209 = vmatprep.subr.mxu0 0.0
    %210 = vmatpush1.msra.mxu0 0.0
    %211 = vmatprep.subr.mxu0 0.0
    %212 = vmatpush1.msra.mxu0 0.0
    %213 = vmatprep.subr.mxu0 0.0
    %214 = vmatpush1.msra.mxu0 0.0
    %215 = vmatprep.subr.mxu0 0.0
    %216 = vmatpush1.msra.mxu0 0.0
    %217 = vmatprep.subr.mxu0 0.0
    %218 = vmatpush1.msra.mxu0 0.0
    %219 = vmatprep.subr.mxu0 0.0
    %220 = vmatpush1.msra.mxu0 0.0
    %221 = vmatprep.subr.mxu0 0.0
    %222 = vmatpush1.msra.mxu0 0.0
    %223 = vmatprep.mubr.f32.mxu0 0.0
    %224 = vmatmul.mubr.f32.gmra.mrb[0].mxu0 %v157
    %v225 = vpop.f32.mrb[0].mxu0
    %v226 = vadd.f32 0.0, %v225
    %v227 = vpop.f32.mrb[0].mxu0
    %v228 = vadd.f32 0.0, %v227
    %229 = vdwg.mxu0
    %230 = vmatprep.subr.mxu0 %v112
    %231 = vmatpush1.msra.mxu0 %v113
    %232 = vmatprep.subr.mxu0 %v130
    %233 = vmatpush1.msra.mxu0 %v131
    %234 = vmatprep.subr.mxu0 %v148
    %235 = vmatpush1.msra.mxu0 %v149
    %236 = vmatprep.subr.mxu0 0.0
    %237 = vmatpush1.msra.mxu0 0.0
    %238 = vmatprep.subr.mxu0 0.0
    %239 = vmatpush1.msra.mxu0 0.0
    %240 = vmatprep.subr.mxu0 0.0
    %241 = vmatpush1.msra.mxu0 0.0
    %242 = vmatprep.subr.mxu0 0.0
    %243 = vmatpush1.msra.mxu0 0.0
    %244 = vmatprep.subr.mxu0 0.0
    %245 = vmatpush1.msra.mxu0 0.0
    %246 = vmatprep.subr.mxu0 0.0
    %247 = vmatpush1.msra.mxu0 0.0
    %248 = vmatprep.subr.mxu0 0.0
    %249 = vmatpush1.msra.mxu0 0.0
    %250 = vmatprep.subr.mxu0 0.0
    %251 = vmatpush1.msra.mxu0 0.0
    %252 = vmatprep.subr.mxu0 0.0
    %253 = vmatpush1.msra.mxu0 0.0
    %254 = vmatprep.subr.mxu0 0.0
    %255 = vmatpush1.msra.mxu0 0.0
    %256 = vmatprep.subr.mxu0 0.0
    %257 = vmatpush1.msra.mxu0 0.0
    %258 = vmatprep.subr.mxu0 0.0
    %259 = vmatpush1.msra.mxu0 0.0
    %260 = vmatprep.subr.mxu0 0.0
    %261 = vmatpush1.msra.mxu0 0.0
    %262 = vmatprep.subr.mxu0 0.0
    %263 = vmatpush1.msra.mxu0 0.0
    %264 = vmatprep.subr.mxu0 0.0
    %265 = vmatpush1.msra.mxu0 0.0
    %266 = vmatprep.subr.mxu0 0.0
    %267 = vmatpush1.msra.mxu0 0.0
    %268 = vmatprep.subr.mxu0 0.0
    %269 = vmatpush1.msra.mxu0 0.0
    %270 = vmatprep.subr.mxu0 0.0
    %271 = vmatpush1.msra.mxu0 0.0
    %272 = vmatprep.subr.mxu0 0.0
    %273 = vmatpush1.msra.mxu0 0.0
    %274 = vmatprep.subr.mxu0 0.0
    %275 = vmatpush1.msra.mxu0 0.0
    %276 = vmatprep.subr.mxu0 0.0
    %277 = vmatpush1.msra.mxu0 0.0
    %278 = vmatprep.subr.mxu0 0.0
    %279 = vmatpush1.msra.mxu0 0.0
    %280 = vmatprep.subr.mxu0 0.0
    %281 = vmatpush1.msra.mxu0 0.0
    %282 = vmatprep.subr.mxu0 0.0
    %283 = vmatpush1.msra.mxu0 0.0
    %284 = vmatprep.subr.mxu0 0.0
    %285 = vmatpush1.msra.mxu0 0.0
    %286 = vmatprep.subr.mxu0 0.0
    %287 = vmatpush1.msra.mxu0 0.0
    %288 = vmatprep.subr.mxu0 0.0
    %289 = vmatpush1.msra.mxu0 0.0
    %290 = vmatprep.subr.mxu0 0.0
    %291 = vmatpush1.msra.mxu0 0.0
    %292 = vmatprep.subr.mxu0 0.0
    %293 = vmatpush1.msra.mxu0 0.0
    %294 = vmatprep.mubr.f32.mxu0 0.0
    %295 = vmatmul.mubr.f32.gmra.mrb[0].mxu0 %v157
    %v296 = vpop.f32.mrb[0].mxu0
    %v297 = vadd.f32 0.0, %v296
    %v298 = vpop.f32.mrb[0].mxu0
    %v299 = vadd.f32 0.0, %v298
    %300 = vdwg.mxu0
    %301 = vmatprep.subr.mxu0 %v116
    %302 = vmatpush1.msra.mxu0 %v111
    %303 = vmatprep.subr.mxu0 %v134
    %304 = vmatpush1.msra.mxu0 %v129
    %305 = vmatprep.subr.mxu0 %v152
    %306 = vmatpush1.msra.mxu0 %v147
    %307 = vmatprep.subr.mxu0 0.0
    %308 = vmatpush1.msra.mxu0 0.0
    %309 = vmatprep.subr.mxu0 0.0
    %310 = vmatpush1.msra.mxu0 0.0
    %311 = vmatprep.subr.mxu0 0.0
    %312 = vmatpush1.msra.mxu0 0.0
    %313 = vmatprep.subr.mxu0 0.0
    %314 = vmatpush1.msra.mxu0 0.0
    %315 = vmatprep.subr.mxu0 0.0
    %316 = vmatpush1.msra.mxu0 0.0
    %317 = vmatprep.subr.mxu0 0.0
    %318 = vmatpush1.msra.mxu0 0.0
    %319 = vmatprep.subr.mxu0 0.0
    %320 = vmatpush1.msra.mxu0 0.0
    %321 = vmatprep.subr.mxu0 0.0
    %322 = vmatpush1.msra.mxu0 0.0
    %323 = vmatprep.subr.mxu0 0.0
    %324 = vmatpush1.msra.mxu0 0.0
    %325 = vmatprep.subr.mxu0 0.0
    %326 = vmatpush1.msra.mxu0 0.0
    %327 = vmatprep.subr.mxu0 0.0
    %328 = vmatpush1.msra.mxu0 0.0
    %329 = vmatprep.subr.mxu0 0.0
    %330 = vmatpush1.msra.mxu0 0.0
    %331 = vmatprep.subr.mxu0 0.0
    %332 = vmatpush1.msra.mxu0 0.0
    %333 = vmatprep.subr.mxu0 0.0
    %334 = vmatpush1.msra.mxu0 0.0
    %335 = vmatprep.subr.mxu0 0.0
    %336 = vmatpush1.msra.mxu0 0.0
    %337 = vmatprep.subr.mxu0 0.0
    %338 = vmatpush1.msra.mxu0 0.0
    %339 = vmatprep.subr.mxu0 0.0
    %340 = vmatpush1.msra.mxu0 0.0
    %341 = vmatprep.subr.mxu0 0.0
    %342 = vmatpush1.msra.mxu0 0.0
    %343 = vmatprep.subr.mxu0 0.0
    %344 = vmatpush1.msra.mxu0 0.0
    %345 = vmatprep.subr.mxu0 0.0
    %346 = vmatpush1.msra.mxu0 0.0
    %347 = vmatprep.subr.mxu0 0.0
    %348 = vmatpush1.msra.mxu0 0.0
    %349 = vmatprep.subr.mxu0 0.0
    %350 = vmatpush1.msra.mxu0 0.0
    %351 = vmatprep.subr.mxu0 0.0
    %352 = vmatpush1.msra.mxu0 0.0
    %353 = vmatprep.subr.mxu0 0.0
    %354 = vmatpush1.msra.mxu0 0.0
    %355 = vmatprep.subr.mxu0 0.0
    %356 = vmatpush1.msra.mxu0 0.0
    %357 = vmatprep.subr.mxu0 0.0
    %358 = vmatpush1.msra.mxu0 0.0
    %359 = vmatprep.subr.mxu0 0.0
    %360 = vmatpush1.msra.mxu0 0.0
    %361 = vmatprep.subr.mxu0 0.0
    %362 = vmatpush1.msra.mxu0 0.0
    %363 = vmatprep.subr.mxu0 0.0
    %364 = vmatpush1.msra.mxu0 0.0
    %365 = vmatprep.mubr.f32.mxu0 0.0
    %366 = vmatmul.mubr.f32.gmra.mrb[0].mxu0 %v157
    %v367 = vpop.f32.mrb[0].mxu0
    %v368 = vadd.f32 0.0, %v367
    %v369 = vpop.f32.mrb[0].mxu0
    %v370 = vadd.f32 0.0, %v369
    %371 = vdwg.mxu0
    %v373 = vsel %vm155, %v97, 0
    %375 = vmatprep.subr.mxu0 %v51
    %376 = vmatpush1.msra.mxu0 %v50
    %377 = vmatprep.subr.mxu0 %v75
    %378 = vmatpush1.msra.mxu0 %v76
    %379 = vmatprep.subr.mxu0 %v94
    %380 = vmatpush1.msra.mxu0 %v95
    %381 = vmatprep.subr.mxu0 0.0
    %382 = vmatpush1.msra.mxu0 0.0
    %383 = vmatprep.subr.mxu0 0.0
    %384 = vmatpush1.msra.mxu0 0.0
    %385 = vmatprep.subr.mxu0 0.0
    %386 = vmatpush1.msra.mxu0 0.0
    %387 = vmatprep.subr.mxu0 0.0
    %388 = vmatpush1.msra.mxu0 0.0
    %389 = vmatprep.subr.mxu0 0.0
    %390 = vmatpush1.msra.mxu0 0.0
    %391 = vmatprep.subr.mxu0 0.0
    %392 = vmatpush1.msra.mxu0 0.0
    %393 = vmatprep.subr.mxu0 0.0
    %394 = vmatpush1.msra.mxu0 0.0
    %395 = vmatprep.subr.mxu0 0.0
    %396 = vmatpush1.msra.mxu0 0.0
    %397 = vmatprep.subr.mxu0 0.0
    %398 = vmatpush1.msra.mxu0 0.0
    %399 = vmatprep.subr.mxu0 0.0
    %400 = vmatpush1.msra.mxu0 0.0
    %401 = vmatprep.subr.mxu0 0.0
    %402 = vmatpush1.msra.mxu0 0.0
    %403 = vmatprep.subr.mxu0 0.0
    %404 = vmatpush1.msra.mxu0 0.0
    %405 = vmatprep.subr.mxu0 0.0
    %406 = vmatpush1.msra.mxu0 0.0
    %407 = vmatprep.subr.mxu0 0.0
    %408 = vmatpush1.msra.mxu0 0.0
    %409 = vmatprep.subr.mxu0 0.0
    %410 = vmatpush1.msra.mxu0 0.0
    %411 = vmatprep.subr.mxu0 0.0
    %412 = vmatpush1.msra.mxu0 0.0
    %413 = vmatprep.subr.mxu0 0.0
    %414 = vmatpush1.msra.mxu0 0.0
    %415 = vmatprep.subr.mxu0 0.0
    %416 = vmatpush1.msra.mxu0 0.0
    %417 = vmatprep.subr.mxu0 0.0
    %418 = vmatpush1.msra.mxu0 0.0
    %419 = vmatprep.subr.mxu0 0.0
    %420 = vmatpush1.msra.mxu0 0.0
    %421 = vmatprep.subr.mxu0 0.0
    %422 = vmatpush1.msra.mxu0 0.0
    %423 = vmatprep.subr.mxu0 0.0
    %424 = vmatpush1.msra.mxu0 0.0
    %425 = vmatprep.subr.mxu0 0.0
    %426 = vmatpush1.msra.mxu0 0.0
    %427 = vmatprep.subr.mxu0 0.0
    %428 = vmatpush1.msra.mxu0 0.0
    %429 = vmatprep.subr.mxu0 0.0
    %430 = vmatpush1.msra.mxu0 0.0
    %431 = vmatprep.subr.mxu0 0.0
    %432 = vmatpush1.msra.mxu0 0.0
    %433 = vmatprep.subr.mxu0 0.0
    %434 = vmatpush1.msra.mxu0 0.0
    %435 = vmatprep.subr.mxu0 0.0
    %436 = vmatpush1.msra.mxu0 0.0
    %437 = vmatprep.subr.mxu0 0.0
    %438 = vmatpush1.msra.mxu0 0.0
    %439 = vmatprep.mubr.f32.mxu0 0.0
    %440 = vmatmul.mubr.f32.gmra.mrb[0].mxu0 %v373
    %v441 = vpop.f32.mrb[0].mxu0
    %v442 = vadd.f32 %v226, %v441
    %v443 = vpop.f32.mrb[0].mxu0
    %v444 = vadd.f32 %v228, %v443
    %445 = vdwg.mxu0
    %446 = vmatprep.subr.mxu0 %v53
    %447 = vmatpush1.msra.mxu0 %v52
    %448 = vmatprep.subr.mxu0 %v73
    %449 = vmatpush1.msra.mxu0 %v74
    %450 = vmatprep.subr.mxu0 %v92
    %451 = vmatpush1.msra.mxu0 %v93
    %452 = vmatprep.subr.mxu0 0.0
    %453 = vmatpush1.msra.mxu0 0.0
    %454 = vmatprep.subr.mxu0 0.0
    %455 = vmatpush1.msra.mxu0 0.0
    %456 = vmatprep.subr.mxu0 0.0
    %457 = vmatpush1.msra.mxu0 0.0
    %458 = vmatprep.subr.mxu0 0.0
    %459 = vmatpush1.msra.mxu0 0.0
    %460 = vmatprep.subr.mxu0 0.0
    %461 = vmatpush1.msra.mxu0 0.0
    %462 = vmatprep.subr.mxu0 0.0
    %463 = vmatpush1.msra.mxu0 0.0
    %464 = vmatprep.subr.mxu0 0.0
    %465 = vmatpush1.msra.mxu0 0.0
    %466 = vmatprep.subr.mxu0 0.0
    %467 = vmatpush1.msra.mxu0 0.0
    %468 = vmatprep.subr.mxu0 0.0
    %469 = vmatpush1.msra.mxu0 0.0
    %470 = vmatprep.subr.mxu0 0.0
    %471 = vmatpush1.msra.mxu0 0.0
    %472 = vmatprep.subr.mxu0 0.0
    %473 = vmatpush1.msra.mxu0 0.0
    %474 = vmatprep.subr.mxu0 0.0
    %475 = vmatpush1.msra.mxu0 0.0
    %476 = vmatprep.subr.mxu0 0.0
    %477 = vmatpush1.msra.mxu0 0.0
    %478 = vmatprep.subr.mxu0 0.0
    %479 = vmatpush1.msra.mxu0 0.0
    %480 = vmatprep.subr.mxu0 0.0
    %481 = vmatpush1.msra.mxu0 0.0
    %482 = vmatprep.subr.mxu0 0.0
    %483 = vmatpush1.msra.mxu0 0.0
    %484 = vmatprep.subr.mxu0 0.0
    %485 = vmatpush1.msra.mxu0 0.0
    %486 = vmatprep.subr.mxu0 0.0
    %487 = vmatpush1.msra.mxu0 0.0
    %488 = vmatprep.subr.mxu0 0.0
    %489 = vmatpush1.msra.mxu0 0.0
    %490 = vmatprep.subr.mxu0 0.0
    %491 = vmatpush1.msra.mxu0 0.0
    %492 = vmatprep.subr.mxu0 0.0
    %493 = vmatpush1.msra.mxu0 0.0
    %494 = vmatprep.subr.mxu0 0.0
    %495 = vmatpush1.msra.mxu0 0.0
    %496 = vmatprep.subr.mxu0 0.0
    %497 = vmatpush1.msra.mxu0 0.0
    %498 = vmatprep.subr.mxu0 0.0
    %499 = vmatpush1.msra.mxu0 0.0
    %500 = vmatprep.subr.mxu0 0.0
    %501 = vmatpush1.msra.mxu0 0.0
    %502 = vmatprep.subr.mxu0 0.0
    %503 = vmatpush1.msra.mxu0 0.0
    %504 = vmatprep.subr.mxu0 0.0
    %505 = vmatpush1.msra.mxu0 0.0
    %506 = vmatprep.subr.mxu0 0.0
    %507 = vmatpush1.msra.mxu0 0.0
    %508 = vmatprep.subr.mxu0 0.0
    %509 = vmatpush1.msra.mxu0 0.0
    %510 = vmatprep.mubr.f32.mxu0 0.0
    %511 = vmatmul.mubr.f32.gmra.mrb[0].mxu0 %v373
    %v512 = vpop.f32.mrb[0].mxu0
    %v513 = vadd.f32 %v297, %v512
    %v514 = vpop.f32.mrb[0].mxu0
    %v515 = vadd.f32 %v299, %v514
    %516 = vdwg.mxu0
    %517 = vmatprep.subr.mxu0 %v55
    %518 = vmatpush1.msra.mxu0 %v54
    %519 = vmatprep.subr.mxu0 %v77
    %520 = vmatpush1.msra.mxu0 %v72
    %521 = vmatprep.subr.mxu0 %v96
    %522 = vmatpush1.msra.mxu0 %v91
    %523 = vmatprep.subr.mxu0 0.0
    %524 = vmatpush1.msra.mxu0 0.0
    %525 = vmatprep.subr.mxu0 0.0
    %526 = vmatpush1.msra.mxu0 0.0
    %527 = vmatprep.subr.mxu0 0.0
    %528 = vmatpush1.msra.mxu0 0.0
    %529 = vmatprep.subr.mxu0 0.0
    %530 = vmatpush1.msra.mxu0 0.0
    %531 = vmatprep.subr.mxu0 0.0
    %532 = vmatpush1.msra.mxu0 0.0
    %533 = vmatprep.subr.mxu0 0.0
    %534 = vmatpush1.msra.mxu0 0.0
    %535 = vmatprep.subr.mxu0 0.0
    %536 = vmatpush1.msra.mxu0 0.0
    %537 = vmatprep.subr.mxu0 0.0
    %538 = vmatpush1.msra.mxu0 0.0
    %539 = vmatprep.subr.mxu0 0.0
    %540 = vmatpush1.msra.mxu0 0.0
    %541 = vmatprep.subr.mxu0 0.0
    %542 = vmatpush1.msra.mxu0 0.0
    %543 = vmatprep.subr.mxu0 0.0
    %544 = vmatpush1.msra.mxu0 0.0
    %545 = vmatprep.subr.mxu0 0.0
    %546 = vmatpush1.msra.mxu0 0.0
    %547 = vmatprep.subr.mxu0 0.0
    %548 = vmatpush1.msra.mxu0 0.0
    %549 = vmatprep.subr.mxu0 0.0
    %550 = vmatpush1.msra.mxu0 0.0
    %551 = vmatprep.subr.mxu0 0.0
    %552 = vmatpush1.msra.mxu0 0.0
    %553 = vmatprep.subr.mxu0 0.0
    %554 = vmatpush1.msra.mxu0 0.0
    %555 = vmatprep.subr.mxu0 0.0
    %556 = vmatpush1.msra.mxu0 0.0
    %557 = vmatprep.subr.mxu0 0.0
    %558 = vmatpush1.msra.mxu0 0.0
    %559 = vmatprep.subr.mxu0 0.0
    %560 = vmatpush1.msra.mxu0 0.0
    %561 = vmatprep.subr.mxu0 0.0
    %562 = vmatpush1.msra.mxu0 0.0
    %563 = vmatprep.subr.mxu0 0.0
    %564 = vmatpush1.msra.mxu0 0.0
    %565 = vmatprep.subr.mxu0 0.0
    %566 = vmatpush1.msra.mxu0 0.0
    %567 = vmatprep.subr.mxu0 0.0
    %568 = vmatpush1.msra.mxu0 0.0
    %569 = vmatprep.subr.mxu0 0.0
    %570 = vmatpush1.msra.mxu0 0.0
    %571 = vmatprep.subr.mxu0 0.0
    %572 = vmatpush1.msra.mxu0 0.0
    %573 = vmatprep.subr.mxu0 0.0
    %574 = vmatpush1.msra.mxu0 0.0
    %575 = vmatprep.subr.mxu0 0.0
    %576 = vmatpush1.msra.mxu0 0.0
    %577 = vmatprep.subr.mxu0 0.0
    %578 = vmatpush1.msra.mxu0 0.0
    %579 = vmatprep.subr.mxu0 0.0
    %580 = vmatpush1.msra.mxu0 0.0
    %581 = vmatprep.mubr.f32.mxu0 0.0
    %582 = vmatmul.mubr.f32.gmra.mrb[0].mxu0 %v373
    %v583 = vpop.f32.mrb[0].mxu0
    %v584 = vadd.f32 %v368, %v583
    %v585 = vpop.f32.mrb[0].mxu0
    %v586 = vadd.f32 %v370, %v585
    %587 = vdwg.mxu0
    %588 = vrot.lane.b32.xlu0 %v50, 92
    %v589 = vpop.permute.xlu0 %588
    %590 = vrot.lane.b32.xlu0 %v51, 92
    %v591 = vpop.permute.xlu0 %590
    %592 = vrot.lane.b32.xlu0 %v52, 92
    %v593 = vpop.permute.xlu0 %592
    %594 = vrot.lane.b32.xlu0 %v53, 92
    %v595 = vpop.permute.xlu0 %594
    %596 = vrot.lane.b32.xlu0 %v54, 92
    %v597 = vpop.permute.xlu0 %596
    %598 = vrot.lane.b32.xlu0 %v55, 92
    %v599 = vpop.permute.xlu0 %598
    %vm600 = vcmp.lt.s32.totalorder %v70, 92
    %v601 = vsel %vm600, %v597, %v599
    %v602 = vsel %vm600, %v595, %v597
    %v603 = vsel %vm600, %v593, %v595
    %v604 = vsel %vm600, %v591, %v593
    %v605 = vsel %vm600, %v589, %v591
    %v606 = vsel %vm600, %v599, %v589
    %607 = vrot.lane.b32.xlu0 %v605, 127
    %v608 = vpop.permute.xlu0 %607
    %609 = vrot.lane.b32.xlu0 %v604, 127
    %v610 = vpop.permute.xlu0 %609
    %611 = vrot.lane.b32.xlu0 %v603, 127
    %v612 = vpop.permute.xlu0 %611
    %613 = vrot.lane.b32.xlu0 %v602, 127
    %v614 = vpop.permute.xlu0 %613
    %615 = vrot.lane.b32.xlu0 %v601, 127
    %v616 = vpop.permute.xlu0 %615
    %617 = vrot.lane.b32.xlu0 %v606, 127
    %v618 = vpop.permute.xlu0 %617
    %v619 = vsel %vm71, %v616, %v618
    %v620 = vsel %vm71, %v614, %v616
    %v621 = vsel %vm71, %v612, %v614
    %v622 = vsel %vm71, %v610, %v612
    %v623 = vsel %vm71, %v608, %v610
    %v624 = vsel %vm71, %v618, %v608
    %625 = vrot.lane.b32.xlu0 %v605, 126
    %v626 = vpop.permute.xlu0 %625
    %627 = vrot.lane.b32.xlu0 %v604, 126
    %v628 = vpop.permute.xlu0 %627
    %629 = vrot.lane.b32.xlu0 %v603, 126
    %v630 = vpop.permute.xlu0 %629
    %631 = vrot.lane.b32.xlu0 %v602, 126
    %v632 = vpop.permute.xlu0 %631
    %633 = vrot.lane.b32.xlu0 %v601, 126
    %v634 = vpop.permute.xlu0 %633
    %635 = vrot.lane.b32.xlu0 %v606, 126
    %v636 = vpop.permute.xlu0 %635
    %v637 = vsel %vm90, %v634, %v636
    %v638 = vsel %vm90, %v632, %v634
    %v639 = vsel %vm90, %v630, %v632
    %v640 = vsel %vm90, %v628, %v630
    %v641 = vsel %vm90, %v626, %v628
    %v642 = vsel %vm90, %v636, %v626
    %s643 = scalar_lea.vmem [#allocation5], 16
    %v644 = vld [vmem:[%s643] sm:$0xff]
    %v646 = vsel %vm155, %v644, 0
    %648 = vmatprep.subr.mxu0 %v604
    %649 = vmatpush1.msra.mxu0 %v605
    %650 = vmatprep.subr.mxu0 %v622
    %651 = vmatpush1.msra.mxu0 %v623
    %652 = vmatprep.subr.mxu0 %v640
    %653 = vmatpush1.msra.mxu0 %v641
    %654 = vmatprep.subr.mxu0 0.0
    %655 = vmatpush1.msra.mxu0 0.0
    %656 = vmatprep.subr.mxu0 0.0
    %657 = vmatpush1.msra.mxu0 0.0
    %658 = vmatprep.subr.mxu0 0.0
    %659 = vmatpush1.msra.mxu0 0.0
    %660 = vmatprep.subr.mxu0 0.0
    %661 = vmatpush1.msra.mxu0 0.0
    %662 = vmatprep.subr.mxu0 0.0
    %663 = vmatpush1.msra.mxu0 0.0
    %664 = vmatprep.subr.mxu0 0.0
    %665 = vmatpush1.msra.mxu0 0.0
    %666 = vmatprep.subr.mxu0 0.0
    %667 = vmatpush1.msra.mxu0 0.0
    %668 = vmatprep.subr.mxu0 0.0
    %669 = vmatpush1.msra.mxu0 0.0
    %670 = vmatprep.subr.mxu0 0.0
    %671 = vmatpush1.msra.mxu0 0.0
    %672 = vmatprep.subr.mxu0 0.0
    %673 = vmatpush1.msra.mxu0 0.0
    %674 = vmatprep.subr.mxu0 0.0
    %675 = vmatpush1.msra.mxu0 0.0
    %676 = vmatprep.subr.mxu0 0.0
    %677 = vmatpush1.msra.mxu0 0.0
    %678 = vmatprep.subr.mxu0 0.0
    %679 = vmatpush1.msra.mxu0 0.0
    %680 = vmatprep.subr.mxu0 0.0
    %681 = vmatpush1.msra.mxu0 0.0
    %682 = vmatprep.subr.mxu0 0.0
    %683 = vmatpush1.msra.mxu0 0.0
    %684 = vmatprep.subr.mxu0 0.0
    %685 = vmatpush1.msra.mxu0 0.0
    %686 = vmatprep.subr.mxu0 0.0
    %687 = vmatpush1.msra.mxu0 0.0
    %688 = vmatprep.subr.mxu0 0.0
    %689 = vmatpush1.msra.mxu0 0.0
    %690 = vmatprep.subr.mxu0 0.0
    %691 = vmatpush1.msra.mxu0 0.0
    %692 = vmatprep.subr.mxu0 0.0
    %693 = vmatpush1.msra.mxu0 0.0
    %694 = vmatprep.subr.mxu0 0.0
    %695 = vmatpush1.msra.mxu0 0.0
    %696 = vmatprep.subr.mxu0 0.0
    %697 = vmatpush1.msra.mxu0 0.0
    %698 = vmatprep.subr.mxu0 0.0
    %699 = vmatpush1.msra.mxu0 0.0
    %700 = vmatprep.subr.mxu0 0.0
    %701 = vmatpush1.msra.mxu0 0.0
    %702 = vmatprep.subr.mxu0 0.0
    %703 = vmatpush1.msra.mxu0 0.0
    %704 = vmatprep.subr.mxu0 0.0
    %705 = vmatpush1.msra.mxu0 0.0
    %706 = vmatprep.subr.mxu0 0.0
    %707 = vmatpush1.msra.mxu0 0.0
    %708 = vmatprep.subr.mxu0 0.0
    %709 = vmatpush1.msra.mxu0 0.0
    %710 = vmatprep.subr.mxu0 0.0
    %711 = vmatpush1.msra.mxu0 0.0
    %712 = vmatprep.mubr.f32.mxu0 0.0
    %713 = vmatmul.mubr.f32.gmra.mrb[0].mxu0 %v646
    %v714 = vpop.f32.mrb[0].mxu0
    %v715 = vadd.f32 0.0, %v714
    %v716 = vpop.f32.mrb[0].mxu0
    %v717 = vadd.f32 0.0, %v716
    %718 = vdwg.mxu0
    %719 = vmatprep.subr.mxu0 %v602
    %720 = vmatpush1.msra.mxu0 %v603
    %721 = vmatprep.subr.mxu0 %v620
    %722 = vmatpush1.msra.mxu0 %v621
    %723 = vmatprep.subr.mxu0 %v638
    %724 = vmatpush1.msra.mxu0 %v639
    %725 = vmatprep.subr.mxu0 0.0
    %726 = vmatpush1.msra.mxu0 0.0
    %727 = vmatprep.subr.mxu0 0.0
    %728 = vmatpush1.msra.mxu0 0.0
    %729 = vmatprep.subr.mxu0 0.0
    %730 = vmatpush1.msra.mxu0 0.0
    %731 = vmatprep.subr.mxu0 0.0
    %732 = vmatpush1.msra.mxu0 0.0
    %733 = vmatprep.subr.mxu0 0.0
    %734 = vmatpush1.msra.mxu0 0.0
    %735 = vmatprep.subr.mxu0 0.0
    %736 = vmatpush1.msra.mxu0 0.0
    %737 = vmatprep.subr.mxu0 0.0
    %738 = vmatpush1.msra.mxu0 0.0
    %739 = vmatprep.subr.mxu0 0.0
    %740 = vmatpush1.msra.mxu0 0.0
    %741 = vmatprep.subr.mxu0 0.0
    %742 = vmatpush1.msra.mxu0 0.0
    %743 = vmatprep.subr.mxu0 0.0
    %744 = vmatpush1.msra.mxu0 0.0
    %745 = vmatprep.subr.mxu0 0.0
    %746 = vmatpush1.msra.mxu0 0.0
    %747 = vmatprep.subr.mxu0 0.0
    %748 = vmatpush1.msra.mxu0 0.0
    %749 = vmatprep.subr.mxu0 0.0
    %750 = vmatpush1.msra.mxu0 0.0
    %751 = vmatprep.subr.mxu0 0.0
    %752 = vmatpush1.msra.mxu0 0.0
    %753 = vmatprep.subr.mxu0 0.0
    %754 = vmatpush1.msra.mxu0 0.0
    %755 = vmatprep.subr.mxu0 0.0
    %756 = vmatpush1.msra.mxu0 0.0
    %757 = vmatprep.subr.mxu0 0.0
    %758 = vmatpush1.msra.mxu0 0.0
    %759 = vmatprep.subr.mxu0 0.0
    %760 = vmatpush1.msra.mxu0 0.0
    %761 = vmatprep.subr.mxu0 0.0
    %762 = vmatpush1.msra.mxu0 0.0
    %763 = vmatprep.subr.mxu0 0.0
    %764 = vmatpush1.msra.mxu0 0.0
    %765 = vmatprep.subr.mxu0 0.0
    %766 = vmatpush1.msra.mxu0 0.0
    %767 = vmatprep.subr.mxu0 0.0
    %768 = vmatpush1.msra.mxu0 0.0
    %769 = vmatprep.subr.mxu0 0.0
    %770 = vmatpush1.msra.mxu0 0.0
    %771 = vmatprep.subr.mxu0 0.0
    %772 = vmatpush1.msra.mxu0 0.0
    %773 = vmatprep.subr.mxu0 0.0
    %774 = vmatpush1.msra.mxu0 0.0
    %775 = vmatprep.subr.mxu0 0.0
    %776 = vmatpush1.msra.mxu0 0.0
    %777 = vmatprep.subr.mxu0 0.0
    %778 = vmatpush1.msra.mxu0 0.0
    %779 = vmatprep.subr.mxu0 0.0
    %780 = vmatpush1.msra.mxu0 0.0
    %781 = vmatprep.subr.mxu0 0.0
    %782 = vmatpush1.msra.mxu0 0.0
    %783 = vmatprep.mubr.f32.mxu0 0.0
    %784 = vmatmul.mubr.f32.gmra.mrb[0].mxu0 %v646
    %v785 = vpop.f32.mrb[0].mxu0
    %v786 = vadd.f32 0.0, %v785
    %v787 = vpop.f32.mrb[0].mxu0
    %v788 = vadd.f32 0.0, %v787
    %789 = vdwg.mxu0
    %790 = vmatprep.subr.mxu0 %v606
    %791 = vmatpush1.msra.mxu0 %v601
    %792 = vmatprep.subr.mxu0 %v624
    %793 = vmatpush1.msra.mxu0 %v619
    %794 = vmatprep.subr.mxu0 %v642
    %795 = vmatpush1.msra.mxu0 %v637
    %796 = vmatprep.subr.mxu0 0.0
    %797 = vmatpush1.msra.mxu0 0.0
    %798 = vmatprep.subr.mxu0 0.0
    %799 = vmatpush1.msra.mxu0 0.0
    %800 = vmatprep.subr.mxu0 0.0
    %801 = vmatpush1.msra.mxu0 0.0
    %802 = vmatprep.subr.mxu0 0.0
    %803 = vmatpush1.msra.mxu0 0.0
    %804 = vmatprep.subr.mxu0 0.0
    %805 = vmatpush1.msra.mxu0 0.0
    %806 = vmatprep.subr.mxu0 0.0
    %807 = vmatpush1.msra.mxu0 0.0
    %808 = vmatprep.subr.mxu0 0.0
    %809 = vmatpush1.msra.mxu0 0.0
    %810 = vmatprep.subr.mxu0 0.0
    %811 = vmatpush1.msra.mxu0 0.0
    %812 = vmatprep.subr.mxu0 0.0
    %813 = vmatpush1.msra.mxu0 0.0
    %814 = vmatprep.subr.mxu0 0.0
    %815 = vmatpush1.msra.mxu0 0.0
    %816 = vmatprep.subr.mxu0 0.0
    %817 = vmatpush1.msra.mxu0 0.0
    %818 = vmatprep.subr.mxu0 0.0
    %819 = vmatpush1.msra.mxu0 0.0
    %820 = vmatprep.subr.mxu0 0.0
    %821 = vmatpush1.msra.mxu0 0.0
    %822 = vmatprep.subr.mxu0 0.0
    %823 = vmatpush1.msra.mxu0 0.0
    %824 = vmatprep.subr.mxu0 0.0
    %825 = vmatpush1.msra.mxu0 0.0
    %826 = vmatprep.subr.mxu0 0.0
    %827 = vmatpush1.msra.mxu0 0.0
    %828 = vmatprep.subr.mxu0 0.0
    %829 = vmatpush1.msra.mxu0 0.0
    %830 = vmatprep.subr.mxu0 0.0
    %831 = vmatpush1.msra.mxu0 0.0
    %832 = vmatprep.subr.mxu0 0.0
    %833 = vmatpush1.msra.mxu0 0.0
    %834 = vmatprep.subr.mxu0 0.0
    %835 = vmatpush1.msra.mxu0 0.0
    %836 = vmatprep.subr.mxu0 0.0
    %837 = vmatpush1.msra.mxu0 0.0
    %838 = vmatprep.subr.mxu0 0.0
    %839 = vmatpush1.msra.mxu0 0.0
    %840 = vmatprep.subr.mxu0 0.0
    %841 = vmatpush1.msra.mxu0 0.0
    %842 = vmatprep.subr.mxu0 0.0
    %843 = vmatpush1.msra.mxu0 0.0
    %844 = vmatprep.subr.mxu0 0.0
    %845 = vmatpush1.msra.mxu0 0.0
    %846 = vmatprep.subr.mxu0 0.0
    %847 = vmatpush1.msra.mxu0 0.0
    %848 = vmatprep.subr.mxu0 0.0
    %849 = vmatpush1.msra.mxu0 0.0
    %850 = vmatprep.subr.mxu0 0.0
    %851 = vmatpush1.msra.mxu0 0.0
    %852 = vmatprep.subr.mxu0 0.0
    %853 = vmatpush1.msra.mxu0 0.0
    %854 = vmatprep.mubr.f32.mxu0 0.0
    %855 = vmatmul.mubr.f32.gmra.mrb[0].mxu0 %v646
    %v856 = vpop.f32.mrb[0].mxu0
    %v857 = vadd.f32 0.0, %v856
    %v858 = vpop.f32.mrb[0].mxu0
    %v859 = vadd.f32 0.0, %v858
    %860 = vdwg.mxu0
    %v861 = vadd.f32 %v442, %v715
    %v862 = vadd.f32 %v444, %v717
    %v863 = vadd.f32 %v513, %v786
    %v864 = vadd.f32 %v515, %v788
    %v865 = vadd.f32 %v584, %v857
    %v866 = vadd.f32 %v586, %v859
    %v867 = vld [vmem:[%s2] sm:$0xff]
    %869 = vset.pattern.permute.xlu0 0
    %870 = vperm.xlu0 %869, %v867
    %v871 = vpop.permute.xlu0 %870
    %v873 = vadd.f32 %v861, %v871
    %v874 = vadd.f32 %v862, %v871
    %v875 = vadd.f32 %v863, %v871
    %v876 = vadd.f32 %v864, %v871
    %v877 = vadd.f32 %v865, %v871
    %v878 = vadd.f32 %v866, %v871
    %v879 = vmax.f32 %v873, 0.0
    %v880 = vmax.f32 %v874, 0.0
    %v881 = vmax.f32 %v875, 0.0
    %v882 = vmax.f32 %v876, 0.0
    %v883 = vmax.f32 %v877, 0.0
    %v884 = vmax.f32 %v878, 0.0
    %v886 = vlaneseq
    %v887 = vshrl.u32 %v886, 7
    %v888 = vsub.s32 0, %v887
    %v889 = vrot.slane %v56, %v888
    %v890 = vlaneseq
    %v891 = vshrl.u32 %v890, 7
    %v892 = vsub.s32 1, %v891
    %v893 = vrot.slane %v56, %v892
    %v894 = vlaneseq
    %v895 = vshrl.u32 %v894, 7
    %v896 = vsub.s32 2, %v895
    %v897 = vrot.slane %v56, %v896
    %v898 = vlaneseq
    %v899 = vshrl.u32 %v898, 7
    %v900 = vsub.s32 3, %v899
    %v901 = vrot.slane %v56, %v900
    %v902 = vlaneseq
    %v903 = vshrl.u32 %v902, 7
    %v904 = vsub.s32 4, %v903
    %v905 = vrot.slane %v56, %v904
    %v906 = vlaneseq
    %v907 = vshrl.u32 %v906, 7
    %v908 = vsub.s32 5, %v907
    %v909 = vrot.slane %v56, %v908
    %v916 = vmul.f32 %v879, %v889
    %v917 = vmul.f32 %v880, %v893
    %v918 = vmul.f32 %v881, %v897
    %v919 = vmul.f32 %v882, %v901
    %v920 = vmul.f32 %v883, %v905
    %v921 = vmul.f32 %v884, %v909
    %922 = vrot.lane.b32.xlu0 %v916, 19
    %v923 = vpop.permute.xlu0 %922
    %924 = vrot.lane.b32.xlu0 %v917, 19
    %v925 = vpop.permute.xlu0 %924
    %926 = vrot.lane.b32.xlu0 %v918, 19
    %v927 = vpop.permute.xlu0 %926
    %928 = vrot.lane.b32.xlu0 %v919, 19
    %v929 = vpop.permute.xlu0 %928
    %930 = vrot.lane.b32.xlu0 %v920, 19
    %v931 = vpop.permute.xlu0 %930
    %932 = vrot.lane.b32.xlu0 %v921, 19
    %v933 = vpop.permute.xlu0 %932
    %vm934 = vcmp.lt.s32.totalorder %v70, 19
    %v935 = vsel %vm934, %v931, %v933
    %v936 = vsel %vm934, %v929, %v931
    %v937 = vsel %vm934, %v927, %v929
    %v938 = vsel %vm934, %v925, %v927
    %v939 = vsel %vm934, %v923, %v925
    %v940 = vsel %vm934, %v933, %v923
    %941 = vrot.lane.b32.xlu0 %v940, 127
    %v942 = vpop.permute.xlu0 %941
    %943 = vrot.lane.b32.xlu0 %v939, 127
    %v944 = vpop.permute.xlu0 %943
    %945 = vrot.lane.b32.xlu0 %v938, 127
    %v946 = vpop.permute.xlu0 %945
    %947 = vrot.lane.b32.xlu0 %v937, 127
    %v948 = vpop.permute.xlu0 %947
    %949 = vrot.lane.b32.xlu0 %v936, 127
    %v950 = vpop.permute.xlu0 %949
    %951 = vrot.lane.b32.xlu0 %v935, 127
    %v952 = vpop.permute.xlu0 %951
    %v953 = vsel %vm71, %v950, %v952
    %v954 = vsel %vm71, %v948, %v950
    %v955 = vsel %vm71, %v946, %v948
    %v956 = vsel %vm71, %v944, %v946
    %v957 = vsel %vm71, %v942, %v944
    %v958 = vsel %vm71, %v952, %v942
    %959 = vrot.lane.b32.xlu0 %v940, 126
    %v960 = vpop.permute.xlu0 %959
    %961 = vrot.lane.b32.xlu0 %v939, 126
    %v962 = vpop.permute.xlu0 %961
    %963 = vrot.lane.b32.xlu0 %v938, 126
    %v964 = vpop.permute.xlu0 %963
    %965 = vrot.lane.b32.xlu0 %v937, 126
    %v966 = vpop.permute.xlu0 %965
    %967 = vrot.lane.b32.xlu0 %v936, 126
    %v968 = vpop.permute.xlu0 %967
    %969 = vrot.lane.b32.xlu0 %v935, 126
    %v970 = vpop.permute.xlu0 %969
    %v971 = vsel %vm90, %v968, %v970
    %v972 = vsel %vm90, %v966, %v968
    %v973 = vsel %vm90, %v964, %v966
    %v974 = vsel %vm90, %v962, %v964
    %v975 = vsel %vm90, %v960, %v962
    %v976 = vsel %vm90, %v970, %v960
    %v977 = vld [vmem:[%s3] sm:$0xff]
    %978 = vrot.lane.b32.xlu0 %v916, 1
    %v979 = vpop.permute.xlu0 %978
    %980 = vrot.lane.b32.xlu0 %v917, 1
    %v981 = vpop.permute.xlu0 %980
    %982 = vrot.lane.b32.xlu0 %v918, 1
    %v983 = vpop.permute.xlu0 %982
    %984 = vrot.lane.b32.xlu0 %v919, 1
    %v985 = vpop.permute.xlu0 %984
    %986 = vrot.lane.b32.xlu0 %v920, 1
    %v987 = vpop.permute.xlu0 %986
    %988 = vrot.lane.b32.xlu0 %v921, 1
    %v989 = vpop.permute.xlu0 %988
    %vm990 = vcmp.lt.s32.totalorder %v70, 1
    %v991 = vsel %vm990, %v987, %v989
    %v992 = vsel %vm990, %v985, %v987
    %v993 = vsel %vm990, %v983, %v985
    %v994 = vsel %vm990, %v981, %v983
    %v995 = vsel %vm990, %v979, %v981
    %v996 = vsel %vm990, %v989, %v979
    %997 = vrot.lane.b32.xlu0 %v996, 127
    %v998 = vpop.permute.xlu0 %997
    %999 = vrot.lane.b32.xlu0 %v995, 127
    %v1000 = vpop.permute.xlu0 %999
    %1001 = vrot.lane.b32.xlu0 %v994, 127
    %v1002 = vpop.permute.xlu0 %1001
    %1003 = vrot.lane.b32.xlu0 %v993, 127
    %v1004 = vpop.permute.xlu0 %1003
    %1005 = vrot.lane.b32.xlu0 %v992, 127
    %v1006 = vpop.permute.xlu0 %1005
    %1007 = vrot.lane.b32.xlu0 %v991, 127
    %v1008 = vpop.permute.xlu0 %1007
    %v1009 = vsel %vm71, %v1006, %v1008
    %v1010 = vsel %vm71, %v1004, %v1006
    %v1011 = vsel %vm71, %v1002, %v1004
    %v1012 = vsel %vm71, %v1000, %v1002
    %v1013 = vsel %vm71, %v998, %v1000
    %v1014 = vsel %vm71, %v1008, %v998
    %1015 = vrot.lane.b32.xlu0 %v996, 126
    %v1016 = vpop.permute.xlu0 %1015
    %1017 = vrot.lane.b32.xlu0 %v995, 126
    %v1018 = vpop.permute.xlu0 %1017
    %1019 = vrot.lane.b32.xlu0 %v994, 126
    %v1020 = vpop.permute.xlu0 %1019
    %1021 = vrot.lane.b32.xlu0 %v993, 126
    %v1022 = vpop.permute.xlu0 %1021
    %1023 = vrot.lane.b32.xlu0 %v992, 126
    %v1024 = vpop.permute.xlu0 %1023
    %1025 = vrot.lane.b32.xlu0 %v991, 126
    %v1026 = vpop.permute.xlu0 %1025
    %v1027 = vsel %vm90, %v1024, %v1026
    %v1028 = vsel %vm90, %v1022, %v1024
    %v1029 = vsel %vm90, %v1020, %v1022
    %v1030 = vsel %vm90, %v1018, %v1020
    %v1031 = vsel %vm90, %v1016, %v1018
    %v1032 = vsel %vm90, %v1026, %v1016
    %s1033 = scalar_lea.vmem %s3, 8
    %v1034 = vld [vmem:[%s1033] sm:$0xff]
    %v1036 = vsel %vm155, %v1034, 0
    %1038 = vmatprep.subr.mxu0 %v995
    %1039 = vmatpush1.msra.mxu0 %v996
    %1040 = vmatprep.subr.mxu0 %v1012
    %1041 = vmatpush1.msra.mxu0 %v1013
    %1042 = vmatprep.subr.mxu0 %v1030
    %1043 = vmatpush1.msra.mxu0 %v1031
    %1044 = vmatprep.subr.mxu0 0.0
    %1045 = vmatpush1.msra.mxu0 0.0
    %1046 = vmatprep.subr.mxu0 0.0
    %1047 = vmatpush1.msra.mxu0 0.0
    %1048 = vmatprep.subr.mxu0 0.0
    %1049 = vmatpush1.msra.mxu0 0.0
    %1050 = vmatprep.subr.mxu0 0.0
    %1051 = vmatpush1.msra.mxu0 0.0
    %1052 = vmatprep.subr.mxu0 0.0
    %1053 = vmatpush1.msra.mxu0 0.0
    %1054 = vmatprep.subr.mxu0 0.0
    %1055 = vmatpush1.msra.mxu0 0.0
    %1056 = vmatprep.subr.mxu0 0.0
    %1057 = vmatpush1.msra.mxu0 0.0
    %1058 = vmatprep.subr.mxu0 0.0
    %1059 = vmatpush1.msra.mxu0 0.0
    %1060 = vmatprep.subr.mxu0 0.0
    %1061 = vmatpush1.msra.mxu0 0.0
    %1062 = vmatprep.subr.mxu0 0.0
    %1063 = vmatpush1.msra.mxu0 0.0
    %1064 = vmatprep.subr.mxu0 0.0
    %1065 = vmatpush1.msra.mxu0 0.0
    %1066 = vmatprep.subr.mxu0 0.0
    %1067 = vmatpush1.msra.mxu0 0.0
    %1068 = vmatprep.subr.mxu0 0.0
    %1069 = vmatpush1.msra.mxu0 0.0
    %1070 = vmatprep.subr.mxu0 0.0
    %1071 = vmatpush1.msra.mxu0 0.0
    %1072 = vmatprep.subr.mxu0 0.0
    %1073 = vmatpush1.msra.mxu0 0.0
    %1074 = vmatprep.subr.mxu0 0.0
    %1075 = vmatpush1.msra.mxu0 0.0
    %1076 = vmatprep.subr.mxu0 0.0
    %1077 = vmatpush1.msra.mxu0 0.0
    %1078 = vmatprep.subr.mxu0 0.0
    %1079 = vmatpush1.msra.mxu0 0.0
    %1080 = vmatprep.subr.mxu0 0.0
    %1081 = vmatpush1.msra.mxu0 0.0
    %1082 = vmatprep.subr.mxu0 0.0
    %1083 = vmatpush1.msra.mxu0 0.0
    %1084 = vmatprep.subr.mxu0 0.0
    %1085 = vmatpush1.msra.mxu0 0.0
    %1086 = vmatprep.subr.mxu0 0.0
    %1087 = vmatpush1.msra.mxu0 0.0
    %1088 = vmatprep.subr.mxu0 0.0
    %1089 = vmatpush1.msra.mxu0 0.0
    %1090 = vmatprep.subr.mxu0 0.0
    %1091 = vmatpush1.msra.mxu0 0.0
    %1092 = vmatprep.subr.mxu0 0.0
    %1093 = vmatpush1.msra.mxu0 0.0
    %1094 = vmatprep.subr.mxu0 0.0
    %1095 = vmatpush1.msra.mxu0 0.0
    %1096 = vmatprep.subr.mxu0 0.0
    %1097 = vmatpush1.msra.mxu0 0.0
    %1098 = vmatprep.subr.mxu0 0.0
    %1099 = vmatpush1.msra.mxu0 0.0
    %1100 = vmatprep.subr.mxu0 0.0
    %1101 = vmatpush1.msra.mxu0 0.0
    %1102 = vmatprep.mubr.f32.mxu0 0.0
    %1103 = vmatmul.mubr.f32.gmra.mrb[0].mxu0 %v1036
    %v1104 = vpop.f32.mrb[0].mxu0
    %v1105 = vadd.f32 0.0, %v1104
    %v1106 = vpop.f32.mrb[0].mxu0
    %v1107 = vadd.f32 0.0, %v1106
    %1108 = vdwg.mxu0
    %1109 = vmatprep.subr.mxu0 %v993
    %1110 = vmatpush1.msra.mxu0 %v994
    %1111 = vmatprep.subr.mxu0 %v1010
    %1112 = vmatpush1.msra.mxu0 %v1011
    %1113 = vmatprep.subr.mxu0 %v1028
    %1114 = vmatpush1.msra.mxu0 %v1029
    %1115 = vmatprep.subr.mxu0 0.0
    %1116 = vmatpush1.msra.mxu0 0.0
    %1117 = vmatprep.subr.mxu0 0.0
    %1118 = vmatpush1.msra.mxu0 0.0
    %1119 = vmatprep.subr.mxu0 0.0
    %1120 = vmatpush1.msra.mxu0 0.0
    %1121 = vmatprep.subr.mxu0 0.0
    %1122 = vmatpush1.msra.mxu0 0.0
    %1123 = vmatprep.subr.mxu0 0.0
    %1124 = vmatpush1.msra.mxu0 0.0
    %1125 = vmatprep.subr.mxu0 0.0
    %1126 = vmatpush1.msra.mxu0 0.0
    %1127 = vmatprep.subr.mxu0 0.0
    %1128 = vmatpush1.msra.mxu0 0.0
    %1129 = vmatprep.subr.mxu0 0.0
    %1130 = vmatpush1.msra.mxu0 0.0
    %1131 = vmatprep.subr.mxu0 0.0
    %1132 = vmatpush1.msra.mxu0 0.0
    %1133 = vmatprep.subr.mxu0 0.0
    %1134 = vmatpush1.msra.mxu0 0.0
    %1135 = vmatprep.subr.mxu0 0.0
    %1136 = vmatpush1.msra.mxu0 0.0
    %1137 = vmatprep.subr.mxu0 0.0
    %1138 = vmatpush1.msra.mxu0 0.0
    %1139 = vmatprep.subr.mxu0 0.0
    %1140 = vmatpush1.msra.mxu0 0.0
    %1141 = vmatprep.subr.mxu0 0.0
    %1142 = vmatpush1.msra.mxu0 0.0
    %1143 = vmatprep.subr.mxu0 0.0
    %1144 = vmatpush1.msra.mxu0 0.0
    %1145 = vmatprep.subr.mxu0 0.0
    %1146 = vmatpush1.msra.mxu0 0.0
    %1147 = vmatprep.subr.mxu0 0.0
    %1148 = vmatpush1.msra.mxu0 0.0
    %1149 = vmatprep.subr.mxu0 0.0
    %1150 = vmatpush1.msra.mxu0 0.0
    %1151 = vmatprep.subr.mxu0 0.0
    %1152 = vmatpush1.msra.mxu0 0.0
    %1153 = vmatprep.subr.mxu0 0.0
    %1154 = vmatpush1.msra.mxu0 0.0
    %1155 = vmatprep.subr.mxu0 0.0
    %1156 = vmatpush1.msra.mxu0 0.0
    %1157 = vmatprep.subr.mxu0 0.0
    %1158 = vmatpush1.msra.mxu0 0.0
    %1159 = vmatprep.subr.mxu0 0.0
    %1160 = vmatpush1.msra.mxu0 0.0
    %1161 = vmatprep.subr.mxu0 0.0
    %1162 = vmatpush1.msra.mxu0 0.0
    %1163 = vmatprep.subr.mxu0 0.0
    %1164 = vmatpush1.msra.mxu0 0.0
    %1165 = vmatprep.subr.mxu0 0.0
    %1166 = vmatpush1.msra.mxu0 0.0
    %1167 = vmatprep.subr.mxu0 0.0
    %1168 = vmatpush1.msra.mxu0 0.0
    %1169 = vmatprep.subr.mxu0 0.0
    %1170 = vmatpush1.msra.mxu0 0.0
    %1171 = vmatprep.subr.mxu0 0.0
    %1172 = vmatpush1.msra.mxu0 0.0
    %1173 = vmatprep.mubr.f32.mxu0 0.0
    %1174 = vmatmul.mubr.f32.gmra.mrb[0].mxu0 %v1036
    %v1175 = vpop.f32.mrb[0].mxu0
    %v1176 = vadd.f32 0.0, %v1175
    %v1177 = vpop.f32.mrb[0].mxu0
    %v1178 = vadd.f32 0.0, %v1177
    %1179 = vdwg.mxu0
    %1180 = vmatprep.subr.mxu0 %v991
    %1181 = vmatpush1.msra.mxu0 %v992
    %1182 = vmatprep.subr.mxu0 %v1014
    %1183 = vmatpush1.msra.mxu0 %v1009
    %1184 = vmatprep.subr.mxu0 %v1032
    %1185 = vmatpush1.msra.mxu0 %v1027
    %1186 = vmatprep.subr.mxu0 0.0
    %1187 = vmatpush1.msra.mxu0 0.0
    %1188 = vmatprep.subr.mxu0 0.0
    %1189 = vmatpush1.msra.mxu0 0.0
    %1190 = vmatprep.subr.mxu0 0.0
    %1191 = vmatpush1.msra.mxu0 0.0
    %1192 = vmatprep.subr.mxu0 0.0
    %1193 = vmatpush1.msra.mxu0 0.0
    %1194 = vmatprep.subr.mxu0 0.0
    %1195 = vmatpush1.msra.mxu0 0.0
    %1196 = vmatprep.subr.mxu0 0.0
    %1197 = vmatpush1.msra.mxu0 0.0
    %1198 = vmatprep.subr.mxu0 0.0
    %1199 = vmatpush1.msra.mxu0 0.0
    %1200 = vmatprep.subr.mxu0 0.0
    %1201 = vmatpush1.msra.mxu0 0.0
    %1202 = vmatprep.subr.mxu0 0.0
    %1203 = vmatpush1.msra.mxu0 0.0
    %1204 = vmatprep.subr.mxu0 0.0
    %1205 = vmatpush1.msra.mxu0 0.0
    %1206 = vmatprep.subr.mxu0 0.0
    %1207 = vmatpush1.msra.mxu0 0.0
    %1208 = vmatprep.subr.mxu0 0.0
    %1209 = vmatpush1.msra.mxu0 0.0
    %1210 = vmatprep.subr.mxu0 0.0
    %1211 = vmatpush1.msra.mxu0 0.0
    %1212 = vmatprep.subr.mxu0 0.0
    %1213 = vmatpush1.msra.mxu0 0.0
    %1214 = vmatprep.subr.mxu0 0.0
    %1215 = vmatpush1.msra.mxu0 0.0
    %1216 = vmatprep.subr.mxu0 0.0
    %1217 = vmatpush1.msra.mxu0 0.0
    %1218 = vmatprep.subr.mxu0 0.0
    %1219 = vmatpush1.msra.mxu0 0.0
    %1220 = vmatprep.subr.mxu0 0.0
    %1221 = vmatpush1.msra.mxu0 0.0
    %1222 = vmatprep.subr.mxu0 0.0
    %1223 = vmatpush1.msra.mxu0 0.0
    %1224 = vmatprep.subr.mxu0 0.0
    %1225 = vmatpush1.msra.mxu0 0.0
    %1226 = vmatprep.subr.mxu0 0.0
    %1227 = vmatpush1.msra.mxu0 0.0
    %1228 = vmatprep.subr.mxu0 0.0
    %1229 = vmatpush1.msra.mxu0 0.0
    %1230 = vmatprep.subr.mxu0 0.0
    %1231 = vmatpush1.msra.mxu0 0.0
    %1232 = vmatprep.subr.mxu0 0.0
    %1233 = vmatpush1.msra.mxu0 0.0
    %1234 = vmatprep.subr.mxu0 0.0
    %1235 = vmatpush1.msra.mxu0 0.0
    %1236 = vmatprep.subr.mxu0 0.0
    %1237 = vmatpush1.msra.mxu0 0.0
    %1238 = vmatprep.subr.mxu0 0.0
    %1239 = vmatpush1.msra.mxu0 0.0
    %1240 = vmatprep.subr.mxu0 0.0
    %1241 = vmatpush1.msra.mxu0 0.0
    %1242 = vmatprep.subr.mxu0 0.0
    %1243 = vmatpush1.msra.mxu0 0.0
    %1244 = vmatprep.mubr.f32.mxu0 0.0
    %1245 = vmatmul.mubr.f32.gmra.mrb[0].mxu0 %v1036
    %v1246 = vpop.f32.mrb[0].mxu0
    %v1247 = vadd.f32 0.0, %v1246
    %v1248 = vpop.f32.mrb[0].mxu0
    %v1249 = vadd.f32 0.0, %v1248
    %1250 = vdwg.mxu0
    %v1252 = vsel %vm155, %v977, 0
    %1254 = vmatprep.subr.mxu0 %v939
    %1255 = vmatpush1.msra.mxu0 %v940
    %1256 = vmatprep.subr.mxu0 %v956
    %1257 = vmatpush1.msra.mxu0 %v957
    %1258 = vmatprep.subr.mxu0 %v974
    %1259 = vmatpush1.msra.mxu0 %v975
    %1260 = vmatprep.subr.mxu0 0.0
    %1261 = vmatpush1.msra.mxu0 0.0
    %1262 = vmatprep.subr.mxu0 0.0
    %1263 = vmatpush1.msra.mxu0 0.0
    %1264 = vmatprep.subr.mxu0 0.0
    %1265 = vmatpush1.msra.mxu0 0.0
    %1266 = vmatprep.subr.mxu0 0.0
    %1267 = vmatpush1.msra.mxu0 0.0
    %1268 = vmatprep.subr.mxu0 0.0
    %1269 = vmatpush1.msra.mxu0 0.0
    %1270 = vmatprep.subr.mxu0 0.0
    %1271 = vmatpush1.msra.mxu0 0.0
    %1272 = vmatprep.subr.mxu0 0.0
    %1273 = vmatpush1.msra.mxu0 0.0
    %1274 = vmatprep.subr.mxu0 0.0
    %1275 = vmatpush1.msra.mxu0 0.0
    %1276 = vmatprep.subr.mxu0 0.0
    %1277 = vmatpush1.msra.mxu0 0.0
    %1278 = vmatprep.subr.mxu0 0.0
    %1279 = vmatpush1.msra.mxu0 0.0
    %1280 = vmatprep.subr.mxu0 0.0
    %1281 = vmatpush1.msra.mxu0 0.0
    %1282 = vmatprep.subr.mxu0 0.0
    %1283 = vmatpush1.msra.mxu0 0.0
    %1284 = vmatprep.subr.mxu0 0.0
    %1285 = vmatpush1.msra.mxu0 0.0
    %1286 = vmatprep.subr.mxu0 0.0
    %1287 = vmatpush1.msra.mxu0 0.0
    %1288 = vmatprep.subr.mxu0 0.0
    %1289 = vmatpush1.msra.mxu0 0.0
    %1290 = vmatprep.subr.mxu0 0.0
    %1291 = vmatpush1.msra.mxu0 0.0
    %1292 = vmatprep.subr.mxu0 0.0
    %1293 = vmatpush1.msra.mxu0 0.0
    %1294 = vmatprep.subr.mxu0 0.0
    %1295 = vmatpush1.msra.mxu0 0.0
    %1296 = vmatprep.subr.mxu0 0.0
    %1297 = vmatpush1.msra.mxu0 0.0
    %1298 = vmatprep.subr.mxu0 0.0
    %1299 = vmatpush1.msra.mxu0 0.0
    %1300 = vmatprep.subr.mxu0 0.0
    %1301 = vmatpush1.msra.mxu0 0.0
    %1302 = vmatprep.subr.mxu0 0.0
    %1303 = vmatpush1.msra.mxu0 0.0
    %1304 = vmatprep.subr.mxu0 0.0
    %1305 = vmatpush1.msra.mxu0 0.0
    %1306 = vmatprep.subr.mxu0 0.0
    %1307 = vmatpush1.msra.mxu0 0.0
    %1308 = vmatprep.subr.mxu0 0.0
    %1309 = vmatpush1.msra.mxu0 0.0
    %1310 = vmatprep.subr.mxu0 0.0
    %1311 = vmatpush1.msra.mxu0 0.0
    %1312 = vmatprep.subr.mxu0 0.0
    %1313 = vmatpush1.msra.mxu0 0.0
    %1314 = vmatprep.subr.mxu0 0.0
    %1315 = vmatpush1.msra.mxu0 0.0
    %1316 = vmatprep.subr.mxu0 0.0
    %1317 = vmatpush1.msra.mxu0 0.0
    %1318 = vmatprep.mubr.f32.mxu0 0.0
    %1319 = vmatmul.mubr.f32.gmra.mrb[0].mxu0 %v1252
    %v1320 = vpop.f32.mrb[0].mxu0
    %v1321 = vadd.f32 %v1105, %v1320
    %v1322 = vpop.f32.mrb[0].mxu0
    %v1323 = vadd.f32 %v1107, %v1322
    %1324 = vdwg.mxu0
    %1325 = vmatprep.subr.mxu0 %v937
    %1326 = vmatpush1.msra.mxu0 %v938
    %1327 = vmatprep.subr.mxu0 %v954
    %1328 = vmatpush1.msra.mxu0 %v955
    %1329 = vmatprep.subr.mxu0 %v972
    %1330 = vmatpush1.msra.mxu0 %v973
    %1331 = vmatprep.subr.mxu0 0.0
    %1332 = vmatpush1.msra.mxu0 0.0
    %1333 = vmatprep.subr.mxu0 0.0
    %1334 = vmatpush1.msra.mxu0 0.0
    %1335 = vmatprep.subr.mxu0 0.0
    %1336 = vmatpush1.msra.mxu0 0.0
    %1337 = vmatprep.subr.mxu0 0.0
    %1338 = vmatpush1.msra.mxu0 0.0
    %1339 = vmatprep.subr.mxu0 0.0
    %1340 = vmatpush1.msra.mxu0 0.0
    %1341 = vmatprep.subr.mxu0 0.0
    %1342 = vmatpush1.msra.mxu0 0.0
    %1343 = vmatprep.subr.mxu0 0.0
    %1344 = vmatpush1.msra.mxu0 0.0
    %1345 = vmatprep.subr.mxu0 0.0
    %1346 = vmatpush1.msra.mxu0 0.0
    %1347 = vmatprep.subr.mxu0 0.0
    %1348 = vmatpush1.msra.mxu0 0.0
    %1349 = vmatprep.subr.mxu0 0.0
    %1350 = vmatpush1.msra.mxu0 0.0
    %1351 = vmatprep.subr.mxu0 0.0
    %1352 = vmatpush1.msra.mxu0 0.0
    %1353 = vmatprep.subr.mxu0 0.0
    %1354 = vmatpush1.msra.mxu0 0.0
    %1355 = vmatprep.subr.mxu0 0.0
    %1356 = vmatpush1.msra.mxu0 0.0
    %1357 = vmatprep.subr.mxu0 0.0
    %1358 = vmatpush1.msra.mxu0 0.0
    %1359 = vmatprep.subr.mxu0 0.0
    %1360 = vmatpush1.msra.mxu0 0.0
    %1361 = vmatprep.subr.mxu0 0.0
    %1362 = vmatpush1.msra.mxu0 0.0
    %1363 = vmatprep.subr.mxu0 0.0
    %1364 = vmatpush1.msra.mxu0 0.0
    %1365 = vmatprep.subr.mxu0 0.0
    %1366 = vmatpush1.msra.mxu0 0.0
    %1367 = vmatprep.subr.mxu0 0.0
    %1368 = vmatpush1.msra.mxu0 0.0
    %1369 = vmatprep.subr.mxu0 0.0
    %1370 = vmatpush1.msra.mxu0 0.0
    %1371 = vmatprep.subr.mxu0 0.0
    %1372 = vmatpush1.msra.mxu0 0.0
    %1373 = vmatprep.subr.mxu0 0.0
    %1374 = vmatpush1.msra.mxu0 0.0
    %1375 = vmatprep.subr.mxu0 0.0
    %1376 = vmatpush1.msra.mxu0 0.0
    %1377 = vmatprep.subr.mxu0 0.0
    %1378 = vmatpush1.msra.mxu0 0.0
    %1379 = vmatprep.subr.mxu0 0.0
    %1380 = vmatpush1.msra.mxu0 0.0
    %1381 = vmatprep.subr.mxu0 0.0
    %1382 = vmatpush1.msra.mxu0 0.0
    %1383 = vmatprep.subr.mxu0 0.0
    %1384 = vmatpush1.msra.mxu0 0.0
    %1385 = vmatprep.subr.mxu0 0.0
    %1386 = vmatpush1.msra.mxu0 0.0
    %1387 = vmatprep.subr.mxu0 0.0
    %1388 = vmatpush1.msra.mxu0 0.0
    %1389 = vmatprep.mubr.f32.mxu0 0.0
    %1390 = vmatmul.mubr.f32.gmra.mrb[0].mxu0 %v1252
    %v1391 = vpop.f32.mrb[0].mxu0
    %v1392 = vadd.f32 %v1176, %v1391
    %v1393 = vpop.f32.mrb[0].mxu0
    %v1394 = vadd.f32 %v1178, %v1393
    %1395 = vdwg.mxu0
    %1396 = vmatprep.subr.mxu0 %v935
    %1397 = vmatpush1.msra.mxu0 %v936
    %1398 = vmatprep.subr.mxu0 %v958
    %1399 = vmatpush1.msra.mxu0 %v953
    %1400 = vmatprep.subr.mxu0 %v976
    %1401 = vmatpush1.msra.mxu0 %v971
    %1402 = vmatprep.subr.mxu0 0.0
    %1403 = vmatpush1.msra.mxu0 0.0
    %1404 = vmatprep.subr.mxu0 0.0
    %1405 = vmatpush1.msra.mxu0 0.0
    %1406 = vmatprep.subr.mxu0 0.0
    %1407 = vmatpush1.msra.mxu0 0.0
    %1408 = vmatprep.subr.mxu0 0.0
    %1409 = vmatpush1.msra.mxu0 0.0
    %1410 = vmatprep.subr.mxu0 0.0
    %1411 = vmatpush1.msra.mxu0 0.0
    %1412 = vmatprep.subr.mxu0 0.0
    %1413 = vmatpush1.msra.mxu0 0.0
    %1414 = vmatprep.subr.mxu0 0.0
    %1415 = vmatpush1.msra.mxu0 0.0
    %1416 = vmatprep.subr.mxu0 0.0
    %1417 = vmatpush1.msra.mxu0 0.0
    %1418 = vmatprep.subr.mxu0 0.0
    %1419 = vmatpush1.msra.mxu0 0.0
    %1420 = vmatprep.subr.mxu0 0.0
    %1421 = vmatpush1.msra.mxu0 0.0
    %1422 = vmatprep.subr.mxu0 0.0
    %1423 = vmatpush1.msra.mxu0 0.0
    %1424 = vmatprep.subr.mxu0 0.0
    %1425 = vmatpush1.msra.mxu0 0.0
    %1426 = vmatprep.subr.mxu0 0.0
    %1427 = vmatpush1.msra.mxu0 0.0
    %1428 = vmatprep.subr.mxu0 0.0
    %1429 = vmatpush1.msra.mxu0 0.0
    %1430 = vmatprep.subr.mxu0 0.0
    %1431 = vmatpush1.msra.mxu0 0.0
    %1432 = vmatprep.subr.mxu0 0.0
    %1433 = vmatpush1.msra.mxu0 0.0
    %1434 = vmatprep.subr.mxu0 0.0
    %1435 = vmatpush1.msra.mxu0 0.0
    %1436 = vmatprep.subr.mxu0 0.0
    %1437 = vmatpush1.msra.mxu0 0.0
    %1438 = vmatprep.subr.mxu0 0.0
    %1439 = vmatpush1.msra.mxu0 0.0
    %1440 = vmatprep.subr.mxu0 0.0
    %1441 = vmatpush1.msra.mxu0 0.0
    %1442 = vmatprep.subr.mxu0 0.0
    %1443 = vmatpush1.msra.mxu0 0.0
    %1444 = vmatprep.subr.mxu0 0.0
    %1445 = vmatpush1.msra.mxu0 0.0
    %1446 = vmatprep.subr.mxu0 0.0
    %1447 = vmatpush1.msra.mxu0 0.0
    %1448 = vmatprep.subr.mxu0 0.0
    %1449 = vmatpush1.msra.mxu0 0.0
    %1450 = vmatprep.subr.mxu0 0.0
    %1451 = vmatpush1.msra.mxu0 0.0
    %1452 = vmatprep.subr.mxu0 0.0
    %1453 = vmatpush1.msra.mxu0 0.0
    %1454 = vmatprep.subr.mxu0 0.0
    %1455 = vmatpush1.msra.mxu0 0.0
    %1456 = vmatprep.subr.mxu0 0.0
    %1457 = vmatpush1.msra.mxu0 0.0
    %1458 = vmatprep.subr.mxu0 0.0
    %1459 = vmatpush1.msra.mxu0 0.0
    %1460 = vmatprep.mubr.f32.mxu0 0.0
    %1461 = vmatmul.mubr.f32.gmra.mrb[0].mxu0 %v1252
    %v1462 = vpop.f32.mrb[0].mxu0
    %v1463 = vadd.f32 %v1247, %v1462
    %v1464 = vpop.f32.mrb[0].mxu0
    %v1465 = vadd.f32 %v1249, %v1464
    %1466 = vdwg.mxu0
    %1467 = vrot.lane.b32.xlu0 %v916, 111
    %v1468 = vpop.permute.xlu0 %1467
    %1469 = vrot.lane.b32.xlu0 %v917, 111
    %v1470 = vpop.permute.xlu0 %1469
    %1471 = vrot.lane.b32.xlu0 %v918, 111
    %v1472 = vpop.permute.xlu0 %1471
    %1473 = vrot.lane.b32.xlu0 %v919, 111
    %v1474 = vpop.permute.xlu0 %1473
    %1475 = vrot.lane.b32.xlu0 %v920, 111
    %v1476 = vpop.permute.xlu0 %1475
    %1477 = vrot.lane.b32.xlu0 %v921, 111
    %v1478 = vpop.permute.xlu0 %1477
    %vm1479 = vcmp.lt.s32.totalorder %v70, 111
    %v1480 = vsel %vm1479, %v1476, %v1478
    %v1481 = vsel %vm1479, %v1474, %v1476
    %v1482 = vsel %vm1479, %v1472, %v1474
    %v1483 = vsel %vm1479, %v1470, %v1472
    %v1484 = vsel %vm1479, %v1468, %v1470
    %v1485 = vsel %vm1479, %v1478, %v1468
    %1486 = vrot.lane.b32.xlu0 %v1484, 127
    %v1487 = vpop.permute.xlu0 %1486
    %1488 = vrot.lane.b32.xlu0 %v1483, 127
    %v1489 = vpop.permute.xlu0 %1488
    %1490 = vrot.lane.b32.xlu0 %v1482, 127
    %v1491 = vpop.permute.xlu0 %1490
    %1492 = vrot.lane.b32.xlu0 %v1481, 127
    %v1493 = vpop.permute.xlu0 %1492
    %1494 = vrot.lane.b32.xlu0 %v1480, 127
    %v1495 = vpop.permute.xlu0 %1494
    %1496 = vrot.lane.b32.xlu0 %v1485, 127
    %v1497 = vpop.permute.xlu0 %1496
    %v1498 = vsel %vm71, %v1495, %v1497
    %v1499 = vsel %vm71, %v1493, %v1495
    %v1500 = vsel %vm71, %v1491, %v1493
    %v1501 = vsel %vm71, %v1489, %v1491
    %v1502 = vsel %vm71, %v1487, %v1489
    %v1503 = vsel %vm71, %v1497, %v1487
    %1504 = vrot.lane.b32.xlu0 %v1484, 126
    %v1505 = vpop.permute.xlu0 %1504
    %1506 = vrot.lane.b32.xlu0 %v1483, 126
    %v1507 = vpop.permute.xlu0 %1506
    %1508 = vrot.lane.b32.xlu0 %v1482, 126
    %v1509 = vpop.permute.xlu0 %1508
    %1510 = vrot.lane.b32.xlu0 %v1481, 126
    %v1511 = vpop.permute.xlu0 %1510
    %1512 = vrot.lane.b32.xlu0 %v1480, 126
    %v1513 = vpop.permute.xlu0 %1512
    %1514 = vrot.lane.b32.xlu0 %v1485, 126
    %v1515 = vpop.permute.xlu0 %1514
    %v1516 = vsel %vm90, %v1513, %v1515
    %v1517 = vsel %vm90, %v1511, %v1513
    %v1518 = vsel %vm90, %v1509, %v1511
    %v1519 = vsel %vm90, %v1507, %v1509
    %v1520 = vsel %vm90, %v1505, %v1507
    %v1521 = vsel %vm90, %v1515, %v1505
    %s1522 = scalar_lea.vmem %s3, 16
    %v1523 = vld [vmem:[%s1522] sm:$0xff]
    %v1525 = vsel %vm155, %v1523, 0
    %1527 = vmatprep.subr.mxu0 %v1483
    %1528 = vmatpush1.msra.mxu0 %v1484
    %1529 = vmatprep.subr.mxu0 %v1501
    %1530 = vmatpush1.msra.mxu0 %v1502
    %1531 = vmatprep.subr.mxu0 %v1519
    %1532 = vmatpush1.msra.mxu0 %v1520
    %1533 = vmatprep.subr.mxu0 0.0
    %1534 = vmatpush1.msra.mxu0 0.0
    %1535 = vmatprep.subr.mxu0 0.0
    %1536 = vmatpush1.msra.mxu0 0.0
    %1537 = vmatprep.subr.mxu0 0.0
    %1538 = vmatpush1.msra.mxu0 0.0
    %1539 = vmatprep.subr.mxu0 0.0
    %1540 = vmatpush1.msra.mxu0 0.0
    %1541 = vmatprep.subr.mxu0 0.0
    %1542 = vmatpush1.msra.mxu0 0.0
    %1543 = vmatprep.subr.mxu0 0.0
    %1544 = vmatpush1.msra.mxu0 0.0
    %1545 = vmatprep.subr.mxu0 0.0
    %1546 = vmatpush1.msra.mxu0 0.0
    %1547 = vmatprep.subr.mxu0 0.0
    %1548 = vmatpush1.msra.mxu0 0.0
    %1549 = vmatprep.subr.mxu0 0.0
    %1550 = vmatpush1.msra.mxu0 0.0
    %1551 = vmatprep.subr.mxu0 0.0
    %1552 = vmatpush1.msra.mxu0 0.0
    %1553 = vmatprep.subr.mxu0 0.0
    %1554 = vmatpush1.msra.mxu0 0.0
    %1555 = vmatprep.subr.mxu0 0.0
    %1556 = vmatpush1.msra.mxu0 0.0
    %1557 = vmatprep.subr.mxu0 0.0
    %1558 = vmatpush1.msra.mxu0 0.0
    %1559 = vmatprep.subr.mxu0 0.0
    %1560 = vmatpush1.msra.mxu0 0.0
    %1561 = vmatprep.subr.mxu0 0.0
    %1562 = vmatpush1.msra.mxu0 0.0
    %1563 = vmatprep.subr.mxu0 0.0
    %1564 = vmatpush1.msra.mxu0 0.0
    %1565 = vmatprep.subr.mxu0 0.0
    %1566 = vmatpush1.msra.mxu0 0.0
    %1567 = vmatprep.subr.mxu0 0.0
    %1568 = vmatpush1.msra.mxu0 0.0
    %1569 = vmatprep.subr.mxu0 0.0
    %1570 = vmatpush1.msra.mxu0 0.0
    %1571 = vmatprep.subr.mxu0 0.0
    %1572 = vmatpush1.msra.mxu0 0.0
    %1573 = vmatprep.subr.mxu0 0.0
    %1574 = vmatpush1.msra.mxu0 0.0
    %1575 = vmatprep.subr.mxu0 0.0
    %1576 = vmatpush1.msra.mxu0 0.0
    %1577 = vmatprep.subr.mxu0 0.0
    %1578 = vmatpush1.msra.mxu0 0.0
    %1579 = vmatprep.subr.mxu0 0.0
    %1580 = vmatpush1.msra.mxu0 0.0
    %1581 = vmatprep.subr.mxu0 0.0
    %1582 = vmatpush1.msra.mxu0 0.0
    %1583 = vmatprep.subr.mxu0 0.0
    %1584 = vmatpush1.msra.mxu0 0.0
    %1585 = vmatprep.subr.mxu0 0.0
    %1586 = vmatpush1.msra.mxu0 0.0
    %1587 = vmatprep.subr.mxu0 0.0
    %1588 = vmatpush1.msra.mxu0 0.0
    %1589 = vmatprep.subr.mxu0 0.0
    %1590 = vmatpush1.msra.mxu0 0.0
    %1591 = vmatprep.mubr.f32.mxu0 0.0
    %1592 = vmatmul.mubr.f32.gmra.mrb[0].mxu0 %v1525
    %v1593 = vpop.f32.mrb[0].mxu0
    %v1594 = vadd.f32 0.0, %v1593
    %v1595 = vpop.f32.mrb[0].mxu0
    %v1596 = vadd.f32 0.0, %v1595
    %1597 = vdwg.mxu0
    %1598 = vmatprep.subr.mxu0 %v1481
    %1599 = vmatpush1.msra.mxu0 %v1482
    %1600 = vmatprep.subr.mxu0 %v1499
    %1601 = vmatpush1.msra.mxu0 %v1500
    %1602 = vmatprep.subr.mxu0 %v1517
    %1603 = vmatpush1.msra.mxu0 %v1518
    %1604 = vmatprep.subr.mxu0 0.0
    %1605 = vmatpush1.msra.mxu0 0.0
    %1606 = vmatprep.subr.mxu0 0.0
    %1607 = vmatpush1.msra.mxu0 0.0
    %1608 = vmatprep.subr.mxu0 0.0
    %1609 = vmatpush1.msra.mxu0 0.0
    %1610 = vmatprep.subr.mxu0 0.0
    %1611 = vmatpush1.msra.mxu0 0.0
    %1612 = vmatprep.subr.mxu0 0.0
    %1613 = vmatpush1.msra.mxu0 0.0
    %1614 = vmatprep.subr.mxu0 0.0
    %1615 = vmatpush1.msra.mxu0 0.0
    %1616 = vmatprep.subr.mxu0 0.0
    %1617 = vmatpush1.msra.mxu0 0.0
    %1618 = vmatprep.subr.mxu0 0.0
    %1619 = vmatpush1.msra.mxu0 0.0
    %1620 = vmatprep.subr.mxu0 0.0
    %1621 = vmatpush1.msra.mxu0 0.0
    %1622 = vmatprep.subr.mxu0 0.0
    %1623 = vmatpush1.msra.mxu0 0.0
    %1624 = vmatprep.subr.mxu0 0.0
    %1625 = vmatpush1.msra.mxu0 0.0
    %1626 = vmatprep.subr.mxu0 0.0
    %1627 = vmatpush1.msra.mxu0 0.0
    %1628 = vmatprep.subr.mxu0 0.0
    %1629 = vmatpush1.msra.mxu0 0.0
    %1630 = vmatprep.subr.mxu0 0.0
    %1631 = vmatpush1.msra.mxu0 0.0
    %1632 = vmatprep.subr.mxu0 0.0
    %1633 = vmatpush1.msra.mxu0 0.0
    %1634 = vmatprep.subr.mxu0 0.0
    %1635 = vmatpush1.msra.mxu0 0.0
    %1636 = vmatprep.subr.mxu0 0.0
    %1637 = vmatpush1.msra.mxu0 0.0
    %1638 = vmatprep.subr.mxu0 0.0
    %1639 = vmatpush1.msra.mxu0 0.0
    %1640 = vmatprep.subr.mxu0 0.0
    %1641 = vmatpush1.msra.mxu0 0.0
    %1642 = vmatprep.subr.mxu0 0.0
    %1643 = vmatpush1.msra.mxu0 0.0
    %1644 = vmatprep.subr.mxu0 0.0
    %1645 = vmatpush1.msra.mxu0 0.0
    %1646 = vmatprep.subr.mxu0 0.0
    %1647 = vmatpush1.msra.mxu0 0.0
    %1648 = vmatprep.subr.mxu0 0.0
    %1649 = vmatpush1.msra.mxu0 0.0
    %1650 = vmatprep.subr.mxu0 0.0
    %1651 = vmatpush1.msra.mxu0 0.0
    %1652 = vmatprep.subr.mxu0 0.0
    %1653 = vmatpush1.msra.mxu0 0.0
    %1654 = vmatprep.subr.mxu0 0.0
    %1655 = vmatpush1.msra.mxu0 0.0
    %1656 = vmatprep.subr.mxu0 0.0
    %1657 = vmatpush1.msra.mxu0 0.0
    %1658 = vmatprep.subr.mxu0 0.0
    %1659 = vmatpush1.msra.mxu0 0.0
    %1660 = vmatprep.subr.mxu0 0.0
    %1661 = vmatpush1.msra.mxu0 0.0
    %1662 = vmatprep.mubr.f32.mxu0 0.0
    %1663 = vmatmul.mubr.f32.gmra.mrb[0].mxu0 %v1525
    %v1664 = vpop.f32.mrb[0].mxu0
    %v1665 = vadd.f32 0.0, %v1664
    %v1666 = vpop.f32.mrb[0].mxu0
    %v1667 = vadd.f32 0.0, %v1666
    %1668 = vdwg.mxu0
    %1669 = vmatprep.subr.mxu0 %v1485
    %1670 = vmatpush1.msra.mxu0 %v1480
    %1671 = vmatprep.subr.mxu0 %v1503
    %1672 = vmatpush1.msra.mxu0 %v1498
    %1673 = vmatprep.subr.mxu0 %v1521
    %1674 = vmatpush1.msra.mxu0 %v1516
    %1675 = vmatprep.subr.mxu0 0.0
    %1676 = vmatpush1.msra.mxu0 0.0
    %1677 = vmatprep.subr.mxu0 0.0
    %1678 = vmatpush1.msra.mxu0 0.0
    %1679 = vmatprep.subr.mxu0 0.0
    %1680 = vmatpush1.msra.mxu0 0.0
    %1681 = vmatprep.subr.mxu0 0.0
    %1682 = vmatpush1.msra.mxu0 0.0
    %1683 = vmatprep.subr.mxu0 0.0
    %1684 = vmatpush1.msra.mxu0 0.0
    %1685 = vmatprep.subr.mxu0 0.0
    %1686 = vmatpush1.msra.mxu0 0.0
    %1687 = vmatprep.subr.mxu0 0.0
    %1688 = vmatpush1.msra.mxu0 0.0
    %1689 = vmatprep.subr.mxu0 0.0
    %1690 = vmatpush1.msra.mxu0 0.0
    %1691 = vmatprep.subr.mxu0 0.0
    %1692 = vmatpush1.msra.mxu0 0.0
    %1693 = vmatprep.subr.mxu0 0.0
    %1694 = vmatpush1.msra.mxu0 0.0
    %1695 = vmatprep.subr.mxu0 0.0
    %1696 = vmatpush1.msra.mxu0 0.0
    %1697 = vmatprep.subr.mxu0 0.0
    %1698 = vmatpush1.msra.mxu0 0.0
    %1699 = vmatprep.subr.mxu0 0.0
    %1700 = vmatpush1.msra.mxu0 0.0
    %1701 = vmatprep.subr.mxu0 0.0
    %1702 = vmatpush1.msra.mxu0 0.0
    %1703 = vmatprep.subr.mxu0 0.0
    %1704 = vmatpush1.msra.mxu0 0.0
    %1705 = vmatprep.subr.mxu0 0.0
    %1706 = vmatpush1.msra.mxu0 0.0
    %1707 = vmatprep.subr.mxu0 0.0
    %1708 = vmatpush1.msra.mxu0 0.0
    %1709 = vmatprep.subr.mxu0 0.0
    %1710 = vmatpush1.msra.mxu0 0.0
    %1711 = vmatprep.subr.mxu0 0.0
    %1712 = vmatpush1.msra.mxu0 0.0
    %1713 = vmatprep.subr.mxu0 0.0
    %1714 = vmatpush1.msra.mxu0 0.0
    %1715 = vmatprep.subr.mxu0 0.0
    %1716 = vmatpush1.msra.mxu0 0.0
    %1717 = vmatprep.subr.mxu0 0.0
    %1718 = vmatpush1.msra.mxu0 0.0
    %1719 = vmatprep.subr.mxu0 0.0
    %1720 = vmatpush1.msra.mxu0 0.0
    %1721 = vmatprep.subr.mxu0 0.0
    %1722 = vmatpush1.msra.mxu0 0.0
    %1723 = vmatprep.subr.mxu0 0.0
    %1724 = vmatpush1.msra.mxu0 0.0
    %1725 = vmatprep.subr.mxu0 0.0
    %1726 = vmatpush1.msra.mxu0 0.0
    %1727 = vmatprep.subr.mxu0 0.0
    %1728 = vmatpush1.msra.mxu0 0.0
    %1729 = vmatprep.subr.mxu0 0.0
    %1730 = vmatpush1.msra.mxu0 0.0
    %1731 = vmatprep.subr.mxu0 0.0
    %1732 = vmatpush1.msra.mxu0 0.0
    %1733 = vmatprep.mubr.f32.mxu0 0.0
    %1734 = vmatmul.mubr.f32.gmra.mrb[0].mxu0 %v1525
    %v1735 = vpop.f32.mrb[0].mxu0
    %v1736 = vadd.f32 0.0, %v1735
    %v1737 = vpop.f32.mrb[0].mxu0
    %v1738 = vadd.f32 0.0, %v1737
    %1739 = vdwg.mxu0
    %v1740 = vadd.f32 %v1321, %v1594
    %v1741 = vadd.f32 %v1323, %v1596
    %v1742 = vadd.f32 %v1392, %v1665
    %v1743 = vadd.f32 %v1394, %v1667
    %v1744 = vadd.f32 %v1463, %v1736
    %v1745 = vadd.f32 %v1465, %v1738
    %v1746 = vld [vmem:[%s4] sm:$0xff]
    %1748 = vset.pattern.permute.xlu0 0
    %1749 = vperm.xlu0 %1748, %v1746
    %v1750 = vpop.permute.xlu0 %1749
    %v1752 = vadd.f32 %v1740, %v1750
    %v1753 = vadd.f32 %v1741, %v1750
    %v1754 = vadd.f32 %v1742, %v1750
    %v1755 = vadd.f32 %v1743, %v1750
    %v1756 = vadd.f32 %v1744, %v1750
    %v1757 = vadd.f32 %v1745, %v1750
    %v1758 = vmax.f32 %v1752, 0.0
    %v1759 = vmax.f32 %v1753, 0.0
    %v1760 = vmax.f32 %v1754, 0.0
    %v1761 = vmax.f32 %v1755, 0.0
    %v1762 = vmax.f32 %v1756, 0.0
    %v1763 = vmax.f32 %v1757, 0.0
    %1764 = vst [vmem:[#allocation7] sm:$0xff] %v1758
    %1765 = vst [vmem:[#allocation7 + $0x8] sm:$0xff] %v1759
    %1766 = vst [vmem:[#allocation7 + $0x10] sm:$0xff] %v1760
    %1767 = vst [vmem:[#allocation7 + $0x18] sm:$0xff] %v1761
    %1768 = vst [vmem:[#allocation7 + $0x20] sm:$0xff] %v1762
    %1769 = vst [vmem:[#allocation7 + $0x28] sm:$0xff] %v1763
    // Predicated region
    $region34: #{tpu_custom_call.1} parent=1 // pred_check
      _
    $region35: #{tpu_custom_call.1} parent=1 // pred_check_branch
      %1771 = sbr.rel (0) target = $region37
    $region36: #{tpu_custom_call.1} parent=1 // pred_region
      %s1773 = ssub.s32 768, 768
      %1774 = vsyncadd [#allocation4], %s1773
      %s1776 = sshll.u32 [#allocation7], 4
      %s1777 = int_to_ptr.vmem [resolvable:$true] %s1776
      %1779 = dma.vmem_to_hbm [thread:$0]  %s1777, 768, %s6, [#allocation4]
    $region37: #{tpu_custom_call.1} parent=1 // pred_fallthru
      _
    // Predicated region
    $region38: #{tpu_custom_call.1} parent=1 // pred_check
      _
    $region39: #{tpu_custom_call.1} parent=1 // pred_check_branch
      %1781 = sbr.rel (0) target = $region41
    $region40: #{tpu_custom_call.1} parent=1 // pred_region
      %1782 = dma.done [#allocation4], 768
    $region41: #{tpu_custom_call.1} parent=1 // pred_fallthru
      _
    %1783 = vsyncpa [#allocation3], 1
    %1784 = vsyncpa [#allocation6], 1
    %1785 = vsyncpa [#allocation4], 1

</llo_original>
